<compile_context>
chip_gen: v6e
topology: v6e:2x2x1
jax: 0.10.0
libtpu: 0.0.40
codegen_flags: <defaults>
</compile_context>

<pallas_src>
import functools

import jax
import jax.numpy as jnp
from jax import lax
from jax.experimental import pallas as pl
from jax.experimental.pallas import tpu as pltpu


def _lra_kernel(x_ref, dww_ref, dwb_ref, pww_ref, pwb_ref,
                w1_ref, b1_ref, w2_ref, b2_ref, out_ref, *, H, W, C, TB):
    HW = H * W
    x = x_ref[...]                                    # (TB*C, HW) f32, lane-dense

    # ---- boundary masks (lane iota; no integer division) ----
    lane = lax.broadcasted_iota(jnp.int32, (1, HW), 1)
    not_first_row = lane >= W                         # row > 0
    not_last_row = lane < (H - 1) * W                 # row < H-1
    if (W & (W - 1)) == 0:                            # power-of-two width: shift/AND
        col = lane & (W - 1)
        not_first_col = col > 0
        not_last_col = col < (W - 1)
    else:                                             # float trick (exact while HW <~ 2^23/W)
        lanef = lane.astype(jnp.float32)
        rowf = jnp.floor((lanef + 0.5) * (1.0 / W))
        colf = lanef - rowf * W
        not_first_col = colf > 0.5
        not_last_col = colf < (W - 1) - 0.5

    # ---- depthwise 3x3: factored lane rotations (XLU) + 4 boundary selects ----
    # Column-shifted copies, shared by all three kernel rows.
    xl = jnp.where(not_first_col, pltpu.roll(x, shift=1, axis=1), 0.0)      # x[., p-1]
    xr = jnp.where(not_last_col, pltpu.roll(x, shift=HW - 1, axis=1), 0.0)  # x[., p+1]

    dww = dww_ref[...]                                # (TB*C, 9), tap k = kh*3 + kw
    w = [dww[:, k:k + 1] for k in range(9)]           # per-channel scalars (lane bcast)
    row_top = w[0] * xl + w[1] * x + w[2] * xr        # kh = 0 taps, before row shift
    row_mid = w[3] * xl + w[4] * x + w[5] * xr        # kh = 1
    row_bot = w[6] * xl + w[7] * x + w[8] * xr        # kh = 2, before row shift

    # Per-channel weights commute with the lane rotation, so the row shift is applied
    # once per kernel row on the weighted partial sums.
    acc = (row_mid
           + jnp.where(not_first_row, pltpu.roll(row_top, shift=W, axis=1), 0.0)
           + jnp.where(not_last_row, pltpu.roll(row_bot, shift=HW - W, axis=1), 0.0)
           + dwb_ref[...])                            # (TB*C, 1) bias

    pww = pww_ref[...]                                # (Cout, C)
    pwb = pwb_ref[...]                                # (Cout, 1)
    w1 = w1_ref[...]                                  # (R, Cout)
    b1 = b1_ref[...]                                  # (R, 1)
    w2 = w2_ref[...]                                  # (Cout, R)
    b2 = b2_ref[...]                                  # (Cout, 1)

    # ---- per-batch pointwise 1x1 (MXU) + squeeze-excitation on the shortcut ----
    for b in range(TB):                               # static unroll; TB is small
        sl = slice(b * C, (b + 1) * C)
        xb = x[sl, :]                                 # (C, HW) shortcut (already in VMEM)
        pw = jnp.dot(pww, acc[sl, :], preferred_element_type=jnp.float32) + pwb
        s = jnp.mean(xb, axis=1, keepdims=True)       # (C, 1) global average pool
        h1 = jnp.maximum(
            jnp.dot(w1, s, preferred_element_type=jnp.float32) + b1, 0.0)
        g = jax.nn.sigmoid(
            jnp.dot(w2, h1, preferred_element_type=jnp.float32) + b2)
        out_ref[sl, :] = (pw + xb * g).astype(out_ref.dtype)   # requires C == Cout


def _choose_tb(N, C, HW):
    """Batch elements per grid step: biggest TB that (a) divides N, (b) keeps the
    activation tile within a v7x-safe VMEM budget, (c) keeps >= 2 grid steps when
    N >= 2 (feed both v7x TensorCores), (d) keeps the block sublane-aligned."""
    budget_bytes = 2 * 1024 * 1024                    # v7x-safe activation tile
    max_tb = 8                                        # bound in-kernel unroll / VMEM
    best = None
    for tb in range(1, min(N, max_tb) + 1):
        if N % tb:
            continue
        if tb * C * HW * 4 > budget_bytes:
            continue
        if N >= 2 and N // tb < 2:
            continue
        if (tb * C) % 8 != 0 and tb * C != N * C:
            continue
        best = tb
    return best if best is not None else N            # fallback: whole array, 1 step


def lra_forward(x_nchw, params):
    """Pallas implementation of LRA.forward. x_nchw: (N, C, H, W) float32."""
    N, C, H, W = x_nchw.shape
    Cout = params["pw_w"].shape[0]
    R = params["se_w1"].shape[0]
    assert C == Cout, "LRA forward only works when in_channels == out_channels"
    HW = H * W
    TB = _choose_tb(N, C, HW)
    TBC = TB * C

    # Host-side glue is reshape-only for the activation (NCHW is already (N*C, HW)
    # contiguous -> free); weights are tiny and pre-tiled by TB for the flat layout.
    xf = x_nchw.reshape(N * C, HW)
    dw_w = jnp.tile(params["dw_w"].reshape(C, 9), (TB, 1))    # (TB*C, 9)
    dw_b = jnp.tile(params["dw_b"].reshape(C, 1), (TB, 1))    # (TB*C, 1)
    pw_w = params["pw_w"].reshape(Cout, C)
    pw_b = params["pw_b"].reshape(Cout, 1)
    se_w1 = params["se_w1"].reshape(R, Cout)
    se_b1 = params["se_b1"].reshape(R, 1)
    se_w2 = params["se_w2"].reshape(Cout, R)
    se_b2 = params["se_b2"].reshape(Cout, 1)

    kernel = functools.partial(_lra_kernel, H=H, W=W, C=C, TB=TB)

    weight_bytes = 4 * (dw_w.size + dw_b.size + pw_w.size + pw_b.size
                        + se_w1.size + se_b1.size + se_w2.size + se_b2.size)
    cost = pl.CostEstimate(
        flops=2 * N * Cout * C * HW + 18 * N * C * HW + 4 * N * R * Cout,
        transcendentals=N * Cout,
        bytes_accessed=4 * N * HW * (C + Cout) + weight_bytes,
    )

    out = pl.pallas_call(
        kernel,
        out_shape=jax.ShapeDtypeStruct((N * Cout, HW), jnp.float32),
        grid=(N // TB,),
        in_specs=[
            pl.BlockSpec((TBC, HW), lambda n: (n, 0)),   # activation (shortcut + conv in)
            pl.BlockSpec((TBC, 9), lambda n: (0, 0)),    # depthwise weight (tiled by TB)
            pl.BlockSpec((TBC, 1), lambda n: (0, 0)),    # depthwise bias
            pl.BlockSpec((Cout, C), lambda n: (0, 0)),   # pointwise weight
            pl.BlockSpec((Cout, 1), lambda n: (0, 0)),   # pointwise bias
            pl.BlockSpec((R, Cout), lambda n: (0, 0)),   # SE squeeze weight
            pl.BlockSpec((R, 1), lambda n: (0, 0)),      # SE squeeze bias
            pl.BlockSpec((Cout, R), lambda n: (0, 0)),   # SE excite weight
            pl.BlockSpec((Cout, 1), lambda n: (0, 0)),   # SE excite bias
        ],
        out_specs=pl.BlockSpec((TBC, HW), lambda n: (n, 0)),
        compiler_params=pltpu.CompilerParams(
            dimension_semantics=("parallel",),
            vmem_limit_bytes=32 * 1024 * 1024),
        cost_estimate=cost,
    )(xf, dw_w, dw_b, pw_w, pw_b, se_w1, se_b1, se_w2, se_b2)

    return out.reshape(N, Cout, H, W)


def lra_reference(x, p):
    """Pure-JAX reference mirroring the PyTorch module (NCHW)."""
    C = x.shape[1]
    dw = lax.conv_general_dilated(
        x, p["dw_w"], window_strides=(1, 1), padding=((1, 1), (1, 1)),
        dimension_numbers=("NCHW", "OIHW", "NCHW"), feature_group_count=C)
    dw = dw + p["dw_b"][None, :, None, None]
    pw = lax.conv_general_dilated(
        dw, p["pw_w"], window_strides=(1, 1), padding="VALID",
        dimension_numbers=("NCHW", "OIHW", "NCHW"))
    pw = pw + p["pw_b"][None, :, None, None]
    # SE block on the shortcut
    s = jnp.mean(x, axis=(2, 3))                                   # (N, C)
    h = jnp.maximum(s @ p["se_w1"][:, :, 0, 0].T + p["se_b1"], 0.0)
    g = jax.nn.sigmoid(h @ p["se_w2"][:, :, 0, 0].T + p["se_b2"])
    se = x * g[:, :, None, None]
    return pw + se


def make_params(key, C, Cout, R):
    ks = jax.random.split(key, 8)
    mk = lambda k, shape, scale: (scale * jax.random.normal(k, shape)).astype(jnp.float32)
    return {
        "dw_w": mk(ks[0], (C, 1, 3, 3), 0.2),      # depthwise conv weight (PyTorch layout)
        "dw_b": mk(ks[1], (C,), 0.1),
        "pw_w": mk(ks[2], (Cout, C, 1, 1), 0.2),   # pointwise conv weight
        "pw_b": mk(ks[3], (Cout,), 0.1),
        "se_w1": mk(ks[4], (R, Cout, 1, 1), 0.2),  # SE squeeze conv
        "se_b1": mk(ks[5], (R,), 0.1),
        "se_w2": mk(ks[6], (Cout, R, 1, 1), 0.2),  # SE excite conv
        "se_b2": mk(ks[7], (Cout,), 0.1),
    }


if __name__ == "__main__":
    # in_channels == out_channels (required by the module's own forward);
    # C >= 16 so the SE reduction C // 16 >= 1.
    # N = 4 exercises batch-blocking (TB = 2 -> grid of 2 parallel steps).
    N, C, H, W = 4, 32, 16, 16
    Cout, R = C, C // 16

    key = jax.random.PRNGKey(0)
    kx, kp = jax.random.split(key)
    x = jax.random.normal(kx, (N, C, H, W), dtype=jnp.float32)
    params = make_params(kp, C, Cout, R)

    out = jax.block_until_ready(lra_forward(x, params))
    ref = jax.block_until_ready(lra_reference(x, params))

    assert out.shape == (N, Cout, H, W)
    assert jnp.allclose(out, ref, atol=1e-3, rtol=1e-3), \
        f"max abs err = {jnp.max(jnp.abs(out - ref))}"
    print("KERNEL_OK")
</pallas_src>

<mosaic_0001>
module attributes {stable_mosaic.version = 11 : i64} {
  func.func @_lra_kernel(%arg0: i32, %arg1: memref<64x256xf32, #tpu.memory_space<vmem>>, %arg2: memref<64x9xf32, #tpu.memory_space<vmem>>, %arg3: memref<64x1xf32, #tpu.memory_space<vmem>>, %arg4: memref<32x32xf32, #tpu.memory_space<vmem>>, %arg5: memref<32x1xf32, #tpu.memory_space<vmem>>, %arg6: memref<2x32xf32, #tpu.memory_space<vmem>>, %arg7: memref<2x1xf32, #tpu.memory_space<vmem>>, %arg8: memref<32x2xf32, #tpu.memory_space<vmem>>, %arg9: memref<32x1xf32, #tpu.memory_space<vmem>>, %arg10: memref<64x256xf32, #tpu.memory_space<vmem>>) attributes {dimension_semantics = [#tpu.dimension_semantics<parallel>], iteration_bounds = array<i64: 2>, scalar_prefetch = 0 : i64, scratch_operands = 0 : i64, tpu.core_type = #tpu.core_type<tc>, window_params = [{transform_indices = @transform_0, window_bounds = array<i64: 64, 256>}, {pipeline_mode = #tpu.pipeline_mode<synchronous>, transform_indices = @transform_1, window_bounds = array<i64: 64, 9>}, {pipeline_mode = #tpu.pipeline_mode<synchronous>, transform_indices = @transform_2, window_bounds = array<i64: 64, 1>}, {pipeline_mode = #tpu.pipeline_mode<synchronous>, transform_indices = @transform_3, window_bounds = array<i64: 32, 32>}, {pipeline_mode = #tpu.pipeline_mode<synchronous>, transform_indices = @transform_4, window_bounds = array<i64: 32, 1>}, {pipeline_mode = #tpu.pipeline_mode<synchronous>, transform_indices = @transform_5, window_bounds = array<i64: 2, 32>}, {pipeline_mode = #tpu.pipeline_mode<synchronous>, transform_indices = @transform_6, window_bounds = array<i64: 2, 1>}, {pipeline_mode = #tpu.pipeline_mode<synchronous>, transform_indices = @transform_7, window_bounds = array<i64: 32, 2>}, {pipeline_mode = #tpu.pipeline_mode<synchronous>, transform_indices = @transform_8, window_bounds = array<i64: 32, 1>}, {transform_indices = @transform_9, window_bounds = array<i64: 64, 256>}]} {
    %c0 = arith.constant 0 : index
    %c0_0 = arith.constant 0 : index
    %0 = vector.load %arg1[%c0, %c0_0] : memref<64x256xf32, #tpu.memory_space<vmem>>, vector<64x256xf32>
    %1 = tpu.iota {dimensions = array<i32: 1>} : vector<1x256xi32>
    %c16_i32 = arith.constant 16 : i32
    %2 = vector.broadcast %c16_i32 : i32 to vector<1x256xi32>
    %3 = arith.cmpi sge, %1, %2 : vector<1x256xi32>
    %c240_i32 = arith.constant 240 : i32
    %4 = vector.broadcast %c240_i32 : i32 to vector<1x256xi32>
    %5 = arith.cmpi slt, %1, %4 : vector<1x256xi32>
    %c15_i32 = arith.constant 15 : i32
    %6 = vector.broadcast %c15_i32 : i32 to vector<1x256xi32>
    %7 = arith.andi %1, %6 : vector<1x256xi32>
    %c0_i32 = arith.constant 0 : i32
    %8 = vector.broadcast %c0_i32 : i32 to vector<1x256xi32>
    %9 = arith.cmpi sgt, %7, %8 : vector<1x256xi32>
    %c15_i32_1 = arith.constant 15 : i32
    %10 = vector.broadcast %c15_i32_1 : i32 to vector<1x256xi32>
    %11 = arith.cmpi slt, %7, %10 : vector<1x256xi32>
    %c1_i32 = arith.constant 1 : i32
    %12 = tpu.dynamic_rotate %0 by %c1_i32 dim 1 : vector<64x256xf32>, i32 -> vector<64x256xf32>
    %cst = arith.constant 0.000000e+00 : f32
    %13 = vector.shape_cast %9 : vector<1x256xi1> to vector<1x256xi1>
    %14 = vector.broadcast %13 : vector<1x256xi1> to vector<64x256xi1>
    %15 = vector.broadcast %cst : f32 to vector<64x256xf32>
    %16 = arith.select %14, %12, %15 : vector<64x256xi1>, vector<64x256xf32>
    %c255_i32 = arith.constant 255 : i32
    %17 = tpu.dynamic_rotate %0 by %c255_i32 dim 1 : vector<64x256xf32>, i32 -> vector<64x256xf32>
    %cst_2 = arith.constant 0.000000e+00 : f32
    %18 = vector.shape_cast %11 : vector<1x256xi1> to vector<1x256xi1>
    %19 = vector.broadcast %18 : vector<1x256xi1> to vector<64x256xi1>
    %20 = vector.broadcast %cst_2 : f32 to vector<64x256xf32>
    %21 = arith.select %19, %17, %20 : vector<64x256xi1>, vector<64x256xf32>
    %c0_3 = arith.constant 0 : index
    %c0_4 = arith.constant 0 : index
    %22 = vector.load %arg2[%c0_3, %c0_4] : memref<64x9xf32, #tpu.memory_space<vmem>>, vector<64x9xf32>
    %23 = vector.extract_strided_slice %22 {offsets = [0, 0], sizes = [64, 1], strides = [1, 1]} : vector<64x9xf32> to vector<64x1xf32>
    %24 = vector.extract_strided_slice %22 {offsets = [0, 1], sizes = [64, 1], strides = [1, 1]} : vector<64x9xf32> to vector<64x1xf32>
    %25 = vector.extract_strided_slice %22 {offsets = [0, 2], sizes = [64, 1], strides = [1, 1]} : vector<64x9xf32> to vector<64x1xf32>
    %26 = vector.extract_strided_slice %22 {offsets = [0, 3], sizes = [64, 1], strides = [1, 1]} : vector<64x9xf32> to vector<64x1xf32>
    %27 = vector.extract_strided_slice %22 {offsets = [0, 4], sizes = [64, 1], strides = [1, 1]} : vector<64x9xf32> to vector<64x1xf32>
    %28 = vector.extract_strided_slice %22 {offsets = [0, 5], sizes = [64, 1], strides = [1, 1]} : vector<64x9xf32> to vector<64x1xf32>
    %29 = vector.extract_strided_slice %22 {offsets = [0, 6], sizes = [64, 1], strides = [1, 1]} : vector<64x9xf32> to vector<64x1xf32>
    %30 = vector.extract_strided_slice %22 {offsets = [0, 7], sizes = [64, 1], strides = [1, 1]} : vector<64x9xf32> to vector<64x1xf32>
    %31 = vector.extract_strided_slice %22 {offsets = [0, 8], sizes = [64, 1], strides = [1, 1]} : vector<64x9xf32> to vector<64x1xf32>
    %32 = vector.broadcast %23 : vector<64x1xf32> to vector<64x256xf32>
    %33 = arith.mulf %32, %16 : vector<64x256xf32>
    %34 = vector.broadcast %24 : vector<64x1xf32> to vector<64x256xf32>
    %35 = arith.mulf %34, %0 : vector<64x256xf32>
    %36 = arith.addf %33, %35 : vector<64x256xf32>
    %37 = vector.broadcast %25 : vector<64x1xf32> to vector<64x256xf32>
    %38 = arith.mulf %37, %21 : vector<64x256xf32>
    %39 = arith.addf %36, %38 : vector<64x256xf32>
    %40 = vector.broadcast %26 : vector<64x1xf32> to vector<64x256xf32>
    %41 = arith.mulf %40, %16 : vector<64x256xf32>
    %42 = vector.broadcast %27 : vector<64x1xf32> to vector<64x256xf32>
    %43 = arith.mulf %42, %0 : vector<64x256xf32>
    %44 = arith.addf %41, %43 : vector<64x256xf32>
    %45 = vector.broadcast %28 : vector<64x1xf32> to vector<64x256xf32>
    %46 = arith.mulf %45, %21 : vector<64x256xf32>
    %47 = arith.addf %44, %46 : vector<64x256xf32>
    %48 = vector.broadcast %29 : vector<64x1xf32> to vector<64x256xf32>
    %49 = arith.mulf %48, %16 : vector<64x256xf32>
    %50 = vector.broadcast %30 : vector<64x1xf32> to vector<64x256xf32>
    %51 = arith.mulf %50, %0 : vector<64x256xf32>
    %52 = arith.addf %49, %51 : vector<64x256xf32>
    %53 = vector.broadcast %31 : vector<64x1xf32> to vector<64x256xf32>
    %54 = arith.mulf %53, %21 : vector<64x256xf32>
    %55 = arith.addf %52, %54 : vector<64x256xf32>
    %c16_i32_5 = arith.constant 16 : i32
    %56 = tpu.dynamic_rotate %39 by %c16_i32_5 dim 1 : vector<64x256xf32>, i32 -> vector<64x256xf32>
    %cst_6 = arith.constant 0.000000e+00 : f32
    %57 = vector.shape_cast %3 : vector<1x256xi1> to vector<1x256xi1>
    %58 = vector.broadcast %57 : vector<1x256xi1> to vector<64x256xi1>
    %59 = vector.broadcast %cst_6 : f32 to vector<64x256xf32>
    %60 = arith.select %58, %56, %59 : vector<64x256xi1>, vector<64x256xf32>
    %61 = arith.addf %47, %60 : vector<64x256xf32>
    %c240_i32_7 = arith.constant 240 : i32
    %62 = tpu.dynamic_rotate %55 by %c240_i32_7 dim 1 : vector<64x256xf32>, i32 -> vector<64x256xf32>
    %cst_8 = arith.constant 0.000000e+00 : f32
    %63 = vector.shape_cast %5 : vector<1x256xi1> to vector<1x256xi1>
    %64 = vector.broadcast %63 : vector<1x256xi1> to vector<64x256xi1>
    %65 = vector.broadcast %cst_8 : f32 to vector<64x256xf32>
    %66 = arith.select %64, %62, %65 : vector<64x256xi1>, vector<64x256xf32>
    %67 = arith.addf %61, %66 : vector<64x256xf32>
    %c0_9 = arith.constant 0 : index
    %c0_10 = arith.constant 0 : index
    %68 = vector.load %arg3[%c0_9, %c0_10] : memref<64x1xf32, #tpu.memory_space<vmem>>, vector<64x1xf32>
    %69 = vector.broadcast %68 : vector<64x1xf32> to vector<64x256xf32>
    %70 = arith.addf %67, %69 : vector<64x256xf32>
    %c0_11 = arith.constant 0 : index
    %c0_12 = arith.constant 0 : index
    %71 = vector.load %arg4[%c0_11, %c0_12] : memref<32x32xf32, #tpu.memory_space<vmem>>, vector<32x32xf32>
    %c0_13 = arith.constant 0 : index
    %c0_14 = arith.constant 0 : index
    %72 = vector.load %arg5[%c0_13, %c0_14] : memref<32x1xf32, #tpu.memory_space<vmem>>, vector<32x1xf32>
    %c0_15 = arith.constant 0 : index
    %c0_16 = arith.constant 0 : index
    %73 = vector.load %arg6[%c0_15, %c0_16] : memref<2x32xf32, #tpu.memory_space<vmem>>, vector<2x32xf32>
    %c0_17 = arith.constant 0 : index
    %c0_18 = arith.constant 0 : index
    %74 = vector.load %arg7[%c0_17, %c0_18] : memref<2x1xf32, #tpu.memory_space<vmem>>, vector<2x1xf32>
    %c0_19 = arith.constant 0 : index
    %c0_20 = arith.constant 0 : index
    %75 = vector.load %arg8[%c0_19, %c0_20] : memref<32x2xf32, #tpu.memory_space<vmem>>, vector<32x2xf32>
    %c0_21 = arith.constant 0 : index
    %c0_22 = arith.constant 0 : index
    %76 = vector.load %arg9[%c0_21, %c0_22] : memref<32x1xf32, #tpu.memory_space<vmem>>, vector<32x1xf32>
    %77 = vector.extract_strided_slice %0 {offsets = [0, 0], sizes = [32, 256], strides = [1, 1]} : vector<64x256xf32> to vector<32x256xf32>
    %78 = vector.extract_strided_slice %70 {offsets = [0, 0], sizes = [32, 256], strides = [1, 1]} : vector<64x256xf32> to vector<32x256xf32>
    %cst_23 = arith.constant dense<0.000000e+00> : vector<32x256xf32>
    %79 = tpu.matmul %71, %78, %cst_23 {dimension_numbers = #tpu.dot_dimension_numbers<[1], [0], [0], [1], [0, 0, 1, 1], [], []>} : vector<32x32xf32>, vector<32x256xf32>, vector<32x256xf32> -> vector<32x256xf32>
    %80 = vector.broadcast %72 : vector<32x1xf32> to vector<32x256xf32>
    %81 = arith.addf %79, %80 : vector<32x256xf32>
    %cst_24 = arith.constant dense<0.000000e+00> : vector<32xf32>
    %82 = vector.multi_reduction <add>, %77, %cst_24 [1] : vector<32x256xf32> to vector<32xf32>
    %83 = vector.shape_cast %82 : vector<32xf32> to vector<32x1xf32>
    %cst_25 = arith.constant 2.560000e+02 : f32
    %84 = vector.broadcast %cst_25 : f32 to vector<32x1xf32>
    %85 = arith.divf %83, %84 : vector<32x1xf32>
    %cst_26 = arith.constant dense<0.000000e+00> : vector<2x1xf32>
    %86 = tpu.matmul %73, %85, %cst_26 {dimension_numbers = #tpu.dot_dimension_numbers<[1], [0], [0], [1], [0, 0, 1, 1], [], []>} : vector<2x32xf32>, vector<32x1xf32>, vector<2x1xf32> -> vector<2x1xf32>
    %87 = arith.addf %86, %74 : vector<2x1xf32>
    %cst_27 = arith.constant 0.000000e+00 : f32
    %88 = vector.broadcast %cst_27 : f32 to vector<2x1xf32>
    %89 = arith.maximumf %87, %88 : vector<2x1xf32>
    %cst_28 = arith.constant dense<0.000000e+00> : vector<32x1xf32>
    %90 = tpu.matmul %75, %89, %cst_28 {dimension_numbers = #tpu.dot_dimension_numbers<[1], [0], [0], [1], [0, 0, 1, 1], [], []>} : vector<32x2xf32>, vector<2x1xf32>, vector<32x1xf32> -> vector<32x1xf32>
    %91 = arith.addf %90, %76 : vector<32x1xf32>
    %92 = arith.negf %91 : vector<32x1xf32>
    %93 = math.exp %92 : vector<32x1xf32>
    %cst_29 = arith.constant 1.000000e+00 : f32
    %94 = vector.broadcast %cst_29 : f32 to vector<32x1xf32>
    %95 = arith.addf %94, %93 : vector<32x1xf32>
    %96 = arith.divf %94, %95 : vector<32x1xf32>
    %97 = vector.broadcast %96 : vector<32x1xf32> to vector<32x256xf32>
    %98 = arith.mulf %77, %97 : vector<32x256xf32>
    %99 = arith.addf %81, %98 : vector<32x256xf32>
    %c0_30 = arith.constant 0 : index
    %c0_31 = arith.constant 0 : index
    %100 = vector.load %arg10[%c0_30, %c0_31] : memref<64x256xf32, #tpu.memory_space<vmem>>, vector<32x256xf32>
    tpu.vector_store %arg10[%c0_30, %c0_31], %99 {strides = array<i32>} : memref<64x256xf32, #tpu.memory_space<vmem>>, vector<32x256xf32>,
    %101 = vector.extract_strided_slice %0 {offsets = [32, 0], sizes = [32, 256], strides = [1, 1]} : vector<64x256xf32> to vector<32x256xf32>
    %102 = vector.extract_strided_slice %70 {offsets = [32, 0], sizes = [32, 256], strides = [1, 1]} : vector<64x256xf32> to vector<32x256xf32>
    %cst_32 = arith.constant dense<0.000000e+00> : vector<32x256xf32>
    %103 = tpu.matmul %71, %102, %cst_32 {dimension_numbers = #tpu.dot_dimension_numbers<[1], [0], [0], [1], [0, 0, 1, 1], [], []>} : vector<32x32xf32>, vector<32x256xf32>, vector<32x256xf32> -> vector<32x256xf32>
    %104 = vector.broadcast %72 : vector<32x1xf32> to vector<32x256xf32>
    %105 = arith.addf %103, %104 : vector<32x256xf32>
    %cst_33 = arith.constant dense<0.000000e+00> : vector<32xf32>
    %106 = vector.multi_reduction <add>, %101, %cst_33 [1] : vector<32x256xf32> to vector<32xf32>
    %107 = vector.shape_cast %106 : vector<32xf32> to vector<32x1xf32>
    %cst_34 = arith.constant 2.560000e+02 : f32
    %108 = vector.broadcast %cst_34 : f32 to vector<32x1xf32>
    %109 = arith.divf %107, %108 : vector<32x1xf32>
    %cst_35 = arith.constant dense<0.000000e+00> : vector<2x1xf32>
    %110 = tpu.matmul %73, %109, %cst_35 {dimension_numbers = #tpu.dot_dimension_numbers<[1], [0], [0], [1], [0, 0, 1, 1], [], []>} : vector<2x32xf32>, vector<32x1xf32>, vector<2x1xf32> -> vector<2x1xf32>
    %111 = arith.addf %110, %74 : vector<2x1xf32>
    %cst_36 = arith.constant 0.000000e+00 : f32
    %112 = vector.broadcast %cst_36 : f32 to vector<2x1xf32>
    %113 = arith.maximumf %111, %112 : vector<2x1xf32>
    %cst_37 = arith.constant dense<0.000000e+00> : vector<32x1xf32>
    %114 = tpu.matmul %75, %113, %cst_37 {dimension_numbers = #tpu.dot_dimension_numbers<[1], [0], [0], [1], [0, 0, 1, 1], [], []>} : vector<32x2xf32>, vector<2x1xf32>, vector<32x1xf32> -> vector<32x1xf32>
    %115 = arith.addf %114, %76 : vector<32x1xf32>
    %116 = arith.negf %115 : vector<32x1xf32>
    %117 = math.exp %116 : vector<32x1xf32>
    %cst_38 = arith.constant 1.000000e+00 : f32
    %118 = vector.broadcast %cst_38 : f32 to vector<32x1xf32>
    %119 = arith.addf %118, %117 : vector<32x1xf32>
    %120 = arith.divf %118, %119 : vector<32x1xf32>
    %121 = vector.broadcast %120 : vector<32x1xf32> to vector<32x256xf32>
    %122 = arith.mulf %101, %121 : vector<32x256xf32>
    %123 = arith.addf %105, %122 : vector<32x256xf32>
    %c32 = arith.constant 32 : index
    %c0_39 = arith.constant 0 : index
    %124 = vector.load %arg10[%c32, %c0_39] : memref<64x256xf32, #tpu.memory_space<vmem>>, vector<32x256xf32>
    tpu.vector_store %arg10[%c32, %c0_39], %123 {strides = array<i32>} : memref<64x256xf32, #tpu.memory_space<vmem>>, vector<32x256xf32>,
    return
  }
  func.func @transform_0(%arg0: i32) -> (i32, i32) {
    %c0_i32 = arith.constant 0 : i32
    %c0_i32_0 = arith.constant 0 : i32
    return %arg0, %c0_i32 : i32, i32
  }
  func.func @transform_1(%arg0: i32) -> (i32, i32) {
    %c0_i32 = arith.constant 0 : i32
    %c0_i32_0 = arith.constant 0 : i32
    %c0_i32_1 = arith.constant 0 : i32
    return %c0_i32, %c0_i32_0 : i32, i32
  }
  func.func @transform_2(%arg0: i32) -> (i32, i32) {
    %c0_i32 = arith.constant 0 : i32
    %c0_i32_0 = arith.constant 0 : i32
    %c0_i32_1 = arith.constant 0 : i32
    return %c0_i32, %c0_i32_0 : i32, i32
  }
  func.func @transform_3(%arg0: i32) -> (i32, i32) {
    %c0_i32 = arith.constant 0 : i32
    %c0_i32_0 = arith.constant 0 : i32
    %c0_i32_1 = arith.constant 0 : i32
    return %c0_i32, %c0_i32_0 : i32, i32
  }
  func.func @transform_4(%arg0: i32) -> (i32, i32) {
    %c0_i32 = arith.constant 0 : i32
    %c0_i32_0 = arith.constant 0 : i32
    %c0_i32_1 = arith.constant 0 : i32
    return %c0_i32, %c0_i32_0 : i32, i32
  }
  func.func @transform_5(%arg0: i32) -> (i32, i32) {
    %c0_i32 = arith.constant 0 : i32
    %c0_i32_0 = arith.constant 0 : i32
    %c0_i32_1 = arith.constant 0 : i32
    return %c0_i32, %c0_i32_0 : i32, i32
  }
  func.func @transform_6(%arg0: i32) -> (i32, i32) {
    %c0_i32 = arith.constant 0 : i32
    %c0_i32_0 = arith.constant 0 : i32
    %c0_i32_1 = arith.constant 0 : i32
    return %c0_i32, %c0_i32_0 : i32, i32
  }
  func.func @transform_7(%arg0: i32) -> (i32, i32) {
    %c0_i32 = arith.constant 0 : i32
    %c0_i32_0 = arith.constant 0 : i32
    %c0_i32_1 = arith.constant 0 : i32
    return %c0_i32, %c0_i32_0 : i32, i32
  }
  func.func @transform_8(%arg0: i32) -> (i32, i32) {
    %c0_i32 = arith.constant 0 : i32
    %c0_i32_0 = arith.constant 0 : i32
    %c0_i32_1 = arith.constant 0 : i32
    return %c0_i32, %c0_i32_0 : i32, i32
  }
  func.func @transform_9(%arg0: i32) -> (i32, i32) {
    %c0_i32 = arith.constant 0 : i32
    %c0_i32_0 = arith.constant 0 : i32
    return %arg0, %c0_i32 : i32, i32
  }
}

</mosaic_0001>

<llo_original>
// kernel: tpu_custom_call.1
$region0: #{tpu_custom_call.1}
  #allocation0 [shape = 'u32[]', space=smem, size = 0x4, offset = 0x4, fixed_abs, tag = 'smem constant byte address 0x4 - core index']
  #allocation1 [shape = 'u32[144,128]{1,0:T(1,128)}', space=vmem, size = 0x12000, scoped, tag = 'internal scratch']
  %s0 = inlined_call_operand.hbm [shape: f32[128,256], index: 0, kind: input, shape index: {}]
  %s1 = inlined_call_operand.vmem [shape: f32[64,9], index: 1, kind: input, shape index: {}]
  %s2 = inlined_call_operand.vmem [shape: f32[64,1], index: 2, kind: input, shape index: {}]
  %s3 = inlined_call_operand.vmem [shape: f32[32,32], index: 3, kind: input, shape index: {}]
  %s4 = inlined_call_operand.vmem [shape: f32[32,1], index: 4, kind: input, shape index: {}]
  %s5 = inlined_call_operand.vmem [shape: f32[2,32], index: 5, kind: input, shape index: {}]
  %s6 = inlined_call_operand.vmem [shape: f32[2,1], index: 6, kind: input, shape index: {}]
  %s7 = inlined_call_operand.vmem [shape: f32[32,2], index: 7, kind: input, shape index: {}]
  %s8 = inlined_call_operand.vmem [shape: f32[32,1], index: 8, kind: input, shape index: {}]
  %s9 = inlined_call_operand.hbm [shape: f32[128,256], index: 9, kind: output, shape index: {}]
  %s10 = sld [smem:[#allocation0]]
  $region73: #{tpu_custom_call.1} parent=0
    _
  %s12 = ssub.s32 1, %s10
  %s13 = scalar_select 0, %s12, %s10
  $region1: #{tpu_custom_call.1} parent=0
    #allocation2 [shape = 'u8[131072]{0}', space=vmem, size = 0x20000, scoped, tag = 'input window, operand 0']
    #allocation3 [shape = 's32[2]{0}', space=sflag, size = 0x8, scoped, tag = 'scoped memory for tpu_custom_call.1']
    #allocation4 [shape = 's32[2]{0}', space=sflag, size = 0x8, scoped, tag = 'scoped memory for tpu_custom_call.1']
    #allocation5 [shape = 'u8[131072]{0}', space=vmem, size = 0x20000, scoped, tag = 'output window, operand 0']
    %14 = vsyncpa [#allocation3], 0
    %s15 = scalar_lea.sflag [#allocation3], 1
    %16 = vsyncpa %s15, 0
    %17 = vsyncpa [#allocation4], 0
    %s18 = scalar_lea.sflag [#allocation4], 1
    %19 = vsyncpa %s18, 0
    loop: start=0, step=1, limit=4
    $region2: #{tpu_custom_call.1} parent=1 // loop_pre_header
      _
    $region3: #{tpu_custom_call.1} parent=1 // loop_header
      %s21 = sphi 0, %s25
      %p22 = scmp.ge.s32.totalorder %s21, 4
      %s31 = sphi 0, %s33
      %s34 = sphi 0, %s31
      %s35 = sphi 0, %s34
      %s51 = sphi 0, %s35
      %s55 = sphi 0, %s55
      %s57 = sphi 0, %s55
      %s58 = sphi 0, %s57
      %s72 = sphi 0, %s58
      %s76 = sphi 0, %s76
      %s78 = sphi 0, %s76
      %s79 = sphi 0, %s78
      %s93 = sphi 0, %s79
      %s97 = sphi 0, %s97
      %s99 = sphi 0, %s97
      %s100 = sphi 0, %s99
      %s114 = sphi 0, %s100
      %s118 = sphi 0, %s118
      %s120 = sphi 0, %s118
      %s121 = sphi 0, %s120
      %s135 = sphi 0, %s121
      %s139 = sphi 0, %s139
      %s141 = sphi 0, %s139
      %s142 = sphi 0, %s141
      %s156 = sphi 0, %s142
      %s160 = sphi 0, %s160
      %s162 = sphi 0, %s160
      %s163 = sphi 0, %s162
      %s177 = sphi 0, %s163
      %s181 = sphi 0, %s181
      %s183 = sphi 0, %s181
      %s184 = sphi 0, %s183
      %s198 = sphi 0, %s184
      %s202 = sphi 0, %s202
      %s204 = sphi 0, %s202
      %s205 = sphi 0, %s204
      %s219 = sphi 0, %s205
      %s225 = sphi 0, %s227
      %s228 = sphi 0, %s225
      %s229 = sphi 0, %s228
      %s245 = sphi 0, %s229
    $region4: #{tpu_custom_call.1} parent=1 // loop_header_branch
      %24 = sbr.rel (%p22) target = $region8
    $region5: #{tpu_custom_call.1} parent=1 // loop_body
      %s26 = ssub.s32 %s21, 1
      %s27 = ssub.s32 %s21, 2
      %s28 = sadd.s32 %s21, 1
      %s29 = ssub.s32 %s21, %s28
      %p30 = scmp.eq.s32.totalorder %s29, 0
      %s32 = sadd.s32 %s31, 1
      %s33 = scalar_select %p30, %s31, %s32
      %p36 = pneg %p30
      %p37 = scmp.eq.s32.totalorder %s21, 1
      %p38 = por %p36, %p37
      %p39 = scmp.ne.s32.totalorder %s31, %s34
      %p40 = scmp.eq.s32.totalorder %s21, 0
      %p41 = por %p39, %p40
      %p42 = scmp.ne.s32.totalorder %s31, %s34
      %p43 = scmp.eq.s32.totalorder %s26, 1
      %p44 = por %p42, %p43
      %p45 = scmp.ne.s32.totalorder %s34, %s35
      %p46 = scmp.eq.s32.totalorder %s26, 0
      %p47 = por %p45, %p46
      %p48 = scmp.ne.s32.totalorder %s34, %s35
      %p49 = scmp.eq.s32.totalorder %s27, 1
      %p50 = por %p48, %p49
      %p52 = scmp.ne.s32.totalorder %s35, %s51
      %p53 = scmp.eq.s32.totalorder %s27, 0
      %p54 = por %p52, %p53
      %s56 = sadd.s32 %s55, 1
      %p59 = scmp.eq.s32.totalorder %s21, 1
      %p60 = scmp.ne.s32.totalorder %s55, %s57
      %p61 = scmp.eq.s32.totalorder %s21, 0
      %p62 = por %p60, %p61
      %p63 = scmp.ne.s32.totalorder %s55, %s57
      %p64 = scmp.eq.s32.totalorder %s26, 1
      %p65 = por %p63, %p64
      %p66 = scmp.ne.s32.totalorder %s57, %s58
      %p67 = scmp.eq.s32.totalorder %s26, 0
      %p68 = por %p66, %p67
      %p69 = scmp.ne.s32.totalorder %s57, %s58
      %p70 = scmp.eq.s32.totalorder %s27, 1
      %p71 = por %p69, %p70
      %p73 = scmp.ne.s32.totalorder %s58, %s72
      %p74 = scmp.eq.s32.totalorder %s27, 0
      %p75 = por %p73, %p74
      %s77 = sadd.s32 %s76, 1
      %p80 = scmp.eq.s32.totalorder %s21, 1
      %p81 = scmp.ne.s32.totalorder %s76, %s78
      %p82 = scmp.eq.s32.totalorder %s21, 0
      %p83 = por %p81, %p82
      %p84 = scmp.ne.s32.totalorder %s76, %s78
      %p85 = scmp.eq.s32.totalorder %s26, 1
      %p86 = por %p84, %p85
      %p87 = scmp.ne.s32.totalorder %s78, %s79
      %p88 = scmp.eq.s32.totalorder %s26, 0
      %p89 = por %p87, %p88
      %p90 = scmp.ne.s32.totalorder %s78, %s79
      %p91 = scmp.eq.s32.totalorder %s27, 1
      %p92 = por %p90, %p91
      %p94 = scmp.ne.s32.totalorder %s79, %s93
      %p95 = scmp.eq.s32.totalorder %s27, 0
      %p96 = por %p94, %p95
      %s98 = sadd.s32 %s97, 1
      %p101 = scmp.eq.s32.totalorder %s21, 1
      %p102 = scmp.ne.s32.totalorder %s97, %s99
      %p103 = scmp.eq.s32.totalorder %s21, 0
      %p104 = por %p102, %p103
      %p105 = scmp.ne.s32.totalorder %s97, %s99
      %p106 = scmp.eq.s32.totalorder %s26, 1
      %p107 = por %p105, %p106
      %p108 = scmp.ne.s32.totalorder %s99, %s100
      %p109 = scmp.eq.s32.totalorder %s26, 0
      %p110 = por %p108, %p109
      %p111 = scmp.ne.s32.totalorder %s99, %s100
      %p112 = scmp.eq.s32.totalorder %s27, 1
      %p113 = por %p111, %p112
      %p115 = scmp.ne.s32.totalorder %s100, %s114
      %p116 = scmp.eq.s32.totalorder %s27, 0
      %p117 = por %p115, %p116
      %s119 = sadd.s32 %s118, 1
      %p122 = scmp.eq.s32.totalorder %s21, 1
      %p123 = scmp.ne.s32.totalorder %s118, %s120
      %p124 = scmp.eq.s32.totalorder %s21, 0
      %p125 = por %p123, %p124
      %p126 = scmp.ne.s32.totalorder %s118, %s120
      %p127 = scmp.eq.s32.totalorder %s26, 1
      %p128 = por %p126, %p127
      %p129 = scmp.ne.s32.totalorder %s120, %s121
      %p130 = scmp.eq.s32.totalorder %s26, 0
      %p131 = por %p129, %p130
      %p132 = scmp.ne.s32.totalorder %s120, %s121
      %p133 = scmp.eq.s32.totalorder %s27, 1
      %p134 = por %p132, %p133
      %p136 = scmp.ne.s32.totalorder %s121, %s135
      %p137 = scmp.eq.s32.totalorder %s27, 0
      %p138 = por %p136, %p137
      %s140 = sadd.s32 %s139, 1
      %p143 = scmp.eq.s32.totalorder %s21, 1
      %p144 = scmp.ne.s32.totalorder %s139, %s141
      %p145 = scmp.eq.s32.totalorder %s21, 0
      %p146 = por %p144, %p145
      %p147 = scmp.ne.s32.totalorder %s139, %s141
      %p148 = scmp.eq.s32.totalorder %s26, 1
      %p149 = por %p147, %p148
      %p150 = scmp.ne.s32.totalorder %s141, %s142
      %p151 = scmp.eq.s32.totalorder %s26, 0
      %p152 = por %p150, %p151
      %p153 = scmp.ne.s32.totalorder %s141, %s142
      %p154 = scmp.eq.s32.totalorder %s27, 1
      %p155 = por %p153, %p154
      %p157 = scmp.ne.s32.totalorder %s142, %s156
      %p158 = scmp.eq.s32.totalorder %s27, 0
      %p159 = por %p157, %p158
      %s161 = sadd.s32 %s160, 1
      %p164 = scmp.eq.s32.totalorder %s21, 1
      %p165 = scmp.ne.s32.totalorder %s160, %s162
      %p166 = scmp.eq.s32.totalorder %s21, 0
      %p167 = por %p165, %p166
      %p168 = scmp.ne.s32.totalorder %s160, %s162
      %p169 = scmp.eq.s32.totalorder %s26, 1
      %p170 = por %p168, %p169
      %p171 = scmp.ne.s32.totalorder %s162, %s163
      %p172 = scmp.eq.s32.totalorder %s26, 0
      %p173 = por %p171, %p172
      %p174 = scmp.ne.s32.totalorder %s162, %s163
      %p175 = scmp.eq.s32.totalorder %s27, 1
      %p176 = por %p174, %p175
      %p178 = scmp.ne.s32.totalorder %s163, %s177
      %p179 = scmp.eq.s32.totalorder %s27, 0
      %p180 = por %p178, %p179
      %s182 = sadd.s32 %s181, 1
      %p185 = scmp.eq.s32.totalorder %s21, 1
      %p186 = scmp.ne.s32.totalorder %s181, %s183
      %p187 = scmp.eq.s32.totalorder %s21, 0
      %p188 = por %p186, %p187
      %p189 = scmp.ne.s32.totalorder %s181, %s183
      %p190 = scmp.eq.s32.totalorder %s26, 1
      %p191 = por %p189, %p190
      %p192 = scmp.ne.s32.totalorder %s183, %s184
      %p193 = scmp.eq.s32.totalorder %s26, 0
      %p194 = por %p192, %p193
      %p195 = scmp.ne.s32.totalorder %s183, %s184
      %p196 = scmp.eq.s32.totalorder %s27, 1
      %p197 = por %p195, %p196
      %p199 = scmp.ne.s32.totalorder %s184, %s198
      %p200 = scmp.eq.s32.totalorder %s27, 0
      %p201 = por %p199, %p200
      %s203 = sadd.s32 %s202, 1
      %p206 = scmp.eq.s32.totalorder %s21, 1
      %p207 = scmp.ne.s32.totalorder %s202, %s204
      %p208 = scmp.eq.s32.totalorder %s21, 0
      %p209 = por %p207, %p208
      %p210 = scmp.ne.s32.totalorder %s202, %s204
      %p211 = scmp.eq.s32.totalorder %s26, 1
      %p212 = por %p210, %p211
      %p213 = scmp.ne.s32.totalorder %s204, %s205
      %p214 = scmp.eq.s32.totalorder %s26, 0
      %p215 = por %p213, %p214
      %p216 = scmp.ne.s32.totalorder %s204, %s205
      %p217 = scmp.eq.s32.totalorder %s27, 1
      %p218 = por %p216, %p217
      %p220 = scmp.ne.s32.totalorder %s205, %s219
      %p221 = scmp.eq.s32.totalorder %s27, 0
      %p222 = por %p220, %p221
      %s223 = ssub.s32 %s21, %s28
      %p224 = scmp.eq.s32.totalorder %s223, 0
      %s226 = sadd.s32 %s225, 1
      %s227 = scalar_select %p224, %s225, %s226
      %p230 = pneg %p224
      %p231 = scmp.eq.s32.totalorder %s21, 1
      %p232 = por %p230, %p231
      %p233 = scmp.ne.s32.totalorder %s225, %s228
      %p234 = scmp.eq.s32.totalorder %s21, 0
      %p235 = por %p233, %p234
      %p236 = scmp.ne.s32.totalorder %s225, %s228
      %p237 = scmp.eq.s32.totalorder %s26, 1
      %p238 = por %p236, %p237
      %p239 = scmp.ne.s32.totalorder %s228, %s229
      %p240 = scmp.eq.s32.totalorder %s26, 0
      %p241 = por %p239, %p240
      %p242 = scmp.ne.s32.totalorder %s228, %s229
      %p243 = scmp.eq.s32.totalorder %s27, 1
      %p244 = por %p242, %p243
      %p246 = scmp.ne.s32.totalorder %s229, %s245
      %p247 = scmp.eq.s32.totalorder %s27, 0
      %p248 = por %p246, %p247
      %p249 = scmp.le.s32.totalorder 1, %s21
      %p250 = scmp.lt.s32.totalorder %s21, 3
      %p251 = pnand %p249, %p250
      %p252 = pneg %p251
      // Predicated region
      $region9: #{tpu_custom_call.1} parent=5 // pred_check
        _
      $region10: #{tpu_custom_call.1} parent=5 // pred_check_branch
        %254 = sbr.rel (%p251) target = $region12
      $region11: #{tpu_custom_call.1} parent=5 // pred_region
        %s255 = ssub.s32 %s21, 1
        // Predicated region
        $region13: #{tpu_custom_call.1} parent=11 // pred_check
          %p256 = pneg %p68
        $region14: #{tpu_custom_call.1} parent=11 // pred_check_branch
          %258 = sbr.rel (%p256) target = $region16
        $region15: #{tpu_custom_call.1} parent=11 // pred_region
          _
        $region16: #{tpu_custom_call.1} parent=11 // pred_fallthru
          _
        // Predicated region
        $region17: #{tpu_custom_call.1} parent=11 // pred_check
          %p259 = pneg %p89
        $region18: #{tpu_custom_call.1} parent=11 // pred_check_branch
          %261 = sbr.rel (%p259) target = $region20
        $region19: #{tpu_custom_call.1} parent=11 // pred_region
          _
        $region20: #{tpu_custom_call.1} parent=11 // pred_fallthru
          _
        // Predicated region
        $region21: #{tpu_custom_call.1} parent=11 // pred_check
          %p262 = pneg %p110
        $region22: #{tpu_custom_call.1} parent=11 // pred_check_branch
          %264 = sbr.rel (%p262) target = $region24
        $region23: #{tpu_custom_call.1} parent=11 // pred_region
          _
        $region24: #{tpu_custom_call.1} parent=11 // pred_fallthru
          _
        // Predicated region
        $region25: #{tpu_custom_call.1} parent=11 // pred_check
          %p265 = pneg %p131
        $region26: #{tpu_custom_call.1} parent=11 // pred_check_branch
          %267 = sbr.rel (%p265) target = $region28
        $region27: #{tpu_custom_call.1} parent=11 // pred_region
          _
        $region28: #{tpu_custom_call.1} parent=11 // pred_fallthru
          _
        // Predicated region
        $region29: #{tpu_custom_call.1} parent=11 // pred_check
          %p268 = pneg %p152
        $region30: #{tpu_custom_call.1} parent=11 // pred_check_branch
          %270 = sbr.rel (%p268) target = $region32
        $region31: #{tpu_custom_call.1} parent=11 // pred_region
          _
        $region32: #{tpu_custom_call.1} parent=11 // pred_fallthru
          _
        // Predicated region
        $region33: #{tpu_custom_call.1} parent=11 // pred_check
          %p271 = pneg %p173
        $region34: #{tpu_custom_call.1} parent=11 // pred_check_branch
          %273 = sbr.rel (%p271) target = $region36
        $region35: #{tpu_custom_call.1} parent=11 // pred_region
          _
        $region36: #{tpu_custom_call.1} parent=11 // pred_fallthru
          _
        // Predicated region
        $region37: #{tpu_custom_call.1} parent=11 // pred_check
          %p274 = pneg %p194
        $region38: #{tpu_custom_call.1} parent=11 // pred_check_branch
          %276 = sbr.rel (%p274) target = $region40
        $region39: #{tpu_custom_call.1} parent=11 // pred_region
          _
        $region40: #{tpu_custom_call.1} parent=11 // pred_fallthru
          _
        // Predicated region
        $region41: #{tpu_custom_call.1} parent=11 // pred_check
          %p277 = pneg %p215
        $region42: #{tpu_custom_call.1} parent=11 // pred_check_branch
          %279 = sbr.rel (%p277) target = $region44
        $region43: #{tpu_custom_call.1} parent=11 // pred_region
          _
        $region44: #{tpu_custom_call.1} parent=11 // pred_fallthru
          _
      $region12: #{tpu_custom_call.1} parent=5 // pred_fallthru
        _
      %p280 = scmp.lt.s32.totalorder %s21, 2
      // Predicated region
      $region45: #{tpu_custom_call.1} parent=5 // pred_check
        %p281 = pneg %p280
      $region46: #{tpu_custom_call.1} parent=5 // pred_check_branch
        %283 = sbr.rel (%p281) target = $region48
      $region47: #{tpu_custom_call.1} parent=5 // pred_region
        // Predicated region
        $region49: #{tpu_custom_call.1} parent=47 // pred_check
          %p284 = pneg %p41
        $region50: #{tpu_custom_call.1} parent=47 // pred_check_branch
          %286 = sbr.rel (%p284) target = $region52
        $region51: #{tpu_custom_call.1} parent=47 // pred_region
          %s287 = sand.u32 %s31, 1
          %s288 = scalar_lea.sflag [#allocation3], %s287
          %s289 = sand.u32 %s31, 1
          %s290 = smul.addr %s289, 128
          %s291 = scalar_lea.vmem [#allocation2], %s290
          %s292 = smul.u32 8, %s21
          %s294 = ssub.s32 2048, 2048
          %295 = vsyncadd %s288, %s294
          %s296 = smul.addr %s292, 2
          %s297 = smul.addr %s296, 128
          %s298 = scalar_lea.hbm %s0, %s297
          %s299 = sshll.u32 %s291, 4
          %s300 = int_to_ptr.vmem [resolvable:$true] %s299
          %305 = dma.hbm_to_vmem [thread:$0]  %s298, 2048, %s300, %s288, 256, 256, 16
        $region52: #{tpu_custom_call.1} parent=47 // pred_fallthru
          _
      $region48: #{tpu_custom_call.1} parent=5 // pred_fallthru
        _
      %p306 = scmp.le.s32.totalorder 1, %s21
      %p307 = scmp.lt.s32.totalorder %s21, 3
      %p308 = pnand %p306, %p307
      %p309 = pneg %p308
      // Predicated region
      $region53: #{tpu_custom_call.1} parent=5 // pred_check
        _
      $region54: #{tpu_custom_call.1} parent=5 // pred_check_branch
        %311 = sbr.rel (%p308) target = $region56
      $region55: #{tpu_custom_call.1} parent=5 // pred_region
        %s312 = ssub.s32 %s21, 1
        %s313 = sand.u32 %s34, 1
        %s314 = scalar_lea.sflag [#allocation3], %s313
        %s315 = sand.u32 %s34, 1
        %s316 = smul.addr %s315, 128
        %s317 = scalar_lea.vmem [#allocation2], %s316
        // Predicated region
        $region57: #{tpu_custom_call.1} parent=55 // pred_check
          %p318 = pneg %p47
        $region58: #{tpu_custom_call.1} parent=55 // pred_check_branch
          %320 = sbr.rel (%p318) target = $region60
        $region59: #{tpu_custom_call.1} parent=55 // pred_region
          %321 = dma.done %s314, 2048
        $region60: #{tpu_custom_call.1} parent=55 // pred_fallthru
          _
        %s322 = sand.u32 %s34, 1
        %s323 = scalar_lea.sflag [#allocation3], %s322
        %s324 = sand.u32 %s34, 1
        %s325 = smul.addr %s324, 128
        %s326 = scalar_lea.vmem [#allocation2], %s325
        %p327 = pneg %p47
        %p328 = pneg %p44
        %p329 = pneg %p68
        %p330 = pneg %p65
        %p331 = pneg %p89
        %p332 = pneg %p86
        %p333 = pneg %p110
        %p334 = pneg %p107
        %p335 = pneg %p131
        %p336 = pneg %p128
        %p337 = pneg %p152
        %p338 = pneg %p149
        %p339 = pneg %p173
        %p340 = pneg %p170
        %p341 = pneg %p194
        %p342 = pneg %p191
        %p343 = pneg %p215
        %p344 = pneg %p212
        %p345 = pneg %p241
        %p346 = pneg %p238
        %s347 = sand.u32 %s228, 1
        %s348 = scalar_lea.sflag [#allocation4], %s347
        %s349 = sand.u32 %s228, 1
        %s350 = smul.addr %s349, 128
        %s351 = scalar_lea.vmem [#allocation5], %s350
        %s352 = smul.u32 8, %s26
        %s353 = smul.u32 8, %s26
        %v354 = vld [vmem:[%s317] sm:$0xff]
        %v355 = vld [vmem:[%s317 + $0x8] sm:$0xff]
        %v356 = vld [vmem:[%s317 + $0x10] sm:$0xff]
        %v357 = vld [vmem:[%s317 + $0x18] sm:$0xff]
        %v358 = vld [vmem:[%s317 + $0x20] sm:$0xff]
        %v359 = vld [vmem:[%s317 + $0x28] sm:$0xff]
        %v360 = vld [vmem:[%s317 + $0x30] sm:$0xff]
        %v361 = vld [vmem:[%s317 + $0x38] sm:$0xff]
        %v362 = vld [vmem:[%s317 + $0x40] sm:$0xff]
        %v363 = vld [vmem:[%s317 + $0x48] sm:$0xff]
        %v364 = vld [vmem:[%s317 + $0x50] sm:$0xff]
        %v365 = vld [vmem:[%s317 + $0x58] sm:$0xff]
        %v366 = vld [vmem:[%s317 + $0x60] sm:$0xff]
        %v367 = vld [vmem:[%s317 + $0x68] sm:$0xff]
        %v368 = vld [vmem:[%s317 + $0x70] sm:$0xff]
        %v369 = vld [vmem:[%s317 + $0x78] sm:$0xff]
        %v370 = vlaneseq
        %v371 = vand.u32 %v370, 127
        %v372 = vadd.s32 %v371, 128
        %vm373 = vcmp.ge.s32.totalorder %v371, 16
        %vm374 = vcmp.ge.s32.totalorder %v372, 16
        %vm375 = vcmp.lt.s32.totalorder %v371, 240
        %vm376 = vcmp.lt.s32.totalorder %v372, 240
        %v377 = vand.u32 %v371, 15
        %v378 = vand.u32 %v372, 15
        %vm379 = vcmp.gt.s32.totalorder %v377, 0
        %vm380 = vcmp.gt.s32.totalorder %v378, 0
        %vm381 = vcmp.lt.s32.totalorder %v377, 15
        %vm382 = vcmp.lt.s32.totalorder %v378, 15
        %383 = vrot.lane.b32.xlu0 %v354, 1
        %v384 = vpop.permute.xlu0 %383
        %385 = vrot.lane.b32.xlu0 %v356, 1
        %v386 = vpop.permute.xlu0 %385
        %387 = vrot.lane.b32.xlu0 %v358, 1
        %v388 = vpop.permute.xlu0 %387
        %389 = vrot.lane.b32.xlu0 %v360, 1
        %v390 = vpop.permute.xlu0 %389
        %391 = vrot.lane.b32.xlu0 %v362, 1
        %v392 = vpop.permute.xlu0 %391
        %393 = vrot.lane.b32.xlu0 %v364, 1
        %v394 = vpop.permute.xlu0 %393
        %395 = vrot.lane.b32.xlu0 %v366, 1
        %v396 = vpop.permute.xlu0 %395
        %397 = vrot.lane.b32.xlu0 %v368, 1
        %v398 = vpop.permute.xlu0 %397
        %399 = vrot.lane.b32.xlu0 %v355, 1
        %v400 = vpop.permute.xlu0 %399
        %401 = vrot.lane.b32.xlu0 %v357, 1
        %v402 = vpop.permute.xlu0 %401
        %403 = vrot.lane.b32.xlu0 %v359, 1
        %v404 = vpop.permute.xlu0 %403
        %405 = vrot.lane.b32.xlu0 %v361, 1
        %v406 = vpop.permute.xlu0 %405
        %407 = vrot.lane.b32.xlu0 %v363, 1
        %v408 = vpop.permute.xlu0 %407
        %409 = vrot.lane.b32.xlu0 %v365, 1
        %v410 = vpop.permute.xlu0 %409
        %411 = vrot.lane.b32.xlu0 %v367, 1
        %v412 = vpop.permute.xlu0 %411
        %413 = vrot.lane.b32.xlu0 %v369, 1
        %v414 = vpop.permute.xlu0 %413
        %vm415 = vcmp.lt.s32.totalorder %v371, 1
        %v416 = vsel %vm415, %v384, %v400
        %v417 = vsel %vm415, %v386, %v402
        %v418 = vsel %vm415, %v388, %v404
        %v419 = vsel %vm415, %v390, %v406
        %v420 = vsel %vm415, %v392, %v408
        %v421 = vsel %vm415, %v394, %v410
        %v422 = vsel %vm415, %v396, %v412
        %v423 = vsel %vm415, %v398, %v414
        %v424 = vsel %vm415, %v400, %v384
        %v425 = vsel %vm415, %v402, %v386
        %v426 = vsel %vm415, %v404, %v388
        %v427 = vsel %vm415, %v406, %v390
        %v428 = vsel %vm415, %v408, %v392
        %v429 = vsel %vm415, %v410, %v394
        %v430 = vsel %vm415, %v412, %v396
        %v431 = vsel %vm415, %v414, %v398
        %v432 = vsel %vm379, 1, 0
        %v433 = vsel %vm380, 1, 0
        %vm434 = vcmp.eq.s32.totalorder %v432, 1
        %vm435 = vcmp.eq.s32.totalorder %v433, 1
        %v436 = vsel %vm434, %v424, 0.0
        %v437 = vsel %vm435, %v416, 0.0
        %v438 = vsel %vm434, %v425, 0.0
        %v439 = vsel %vm435, %v417, 0.0
        %v440 = vsel %vm434, %v426, 0.0
        %v441 = vsel %vm435, %v418, 0.0
        %v442 = vsel %vm434, %v427, 0.0
        %v443 = vsel %vm435, %v419, 0.0
        %v444 = vsel %vm434, %v428, 0.0
        %v445 = vsel %vm435, %v420, 0.0
        %v446 = vsel %vm434, %v429, 0.0
        %v447 = vsel %vm435, %v421, 0.0
        %v448 = vsel %vm434, %v430, 0.0
        %v449 = vsel %vm435, %v422, 0.0
        %v450 = vsel %vm434, %v431, 0.0
        %v451 = vsel %vm435, %v423, 0.0
        %452 = vrot.lane.b32.xlu0 %v354, 127
        %v453 = vpop.permute.xlu0 %452
        %454 = vrot.lane.b32.xlu0 %v356, 127
        %v455 = vpop.permute.xlu0 %454
        %456 = vrot.lane.b32.xlu0 %v358, 127
        %v457 = vpop.permute.xlu0 %456
        %458 = vrot.lane.b32.xlu0 %v360, 127
        %v459 = vpop.permute.xlu0 %458
        %460 = vrot.lane.b32.xlu0 %v362, 127
        %v461 = vpop.permute.xlu0 %460
        %462 = vrot.lane.b32.xlu0 %v364, 127
        %v463 = vpop.permute.xlu0 %462
        %464 = vrot.lane.b32.xlu0 %v366, 127
        %v465 = vpop.permute.xlu0 %464
        %466 = vrot.lane.b32.xlu0 %v368, 127
        %v467 = vpop.permute.xlu0 %466
        %468 = vrot.lane.b32.xlu0 %v355, 127
        %v469 = vpop.permute.xlu0 %468
        %470 = vrot.lane.b32.xlu0 %v357, 127
        %v471 = vpop.permute.xlu0 %470
        %472 = vrot.lane.b32.xlu0 %v359, 127
        %v473 = vpop.permute.xlu0 %472
        %474 = vrot.lane.b32.xlu0 %v361, 127
        %v475 = vpop.permute.xlu0 %474
        %476 = vrot.lane.b32.xlu0 %v363, 127
        %v477 = vpop.permute.xlu0 %476
        %478 = vrot.lane.b32.xlu0 %v365, 127
        %v479 = vpop.permute.xlu0 %478
        %480 = vrot.lane.b32.xlu0 %v367, 127
        %v481 = vpop.permute.xlu0 %480
        %482 = vrot.lane.b32.xlu0 %v369, 127
        %v483 = vpop.permute.xlu0 %482
        %vm484 = vcmp.lt.s32.totalorder %v371, 127
        %v485 = vsel %vm484, %v453, %v469
        %v486 = vsel %vm484, %v455, %v471
        %v487 = vsel %vm484, %v457, %v473
        %v488 = vsel %vm484, %v459, %v475
        %v489 = vsel %vm484, %v461, %v477
        %v490 = vsel %vm484, %v463, %v479
        %v491 = vsel %vm484, %v465, %v481
        %v492 = vsel %vm484, %v467, %v483
        %v493 = vsel %vm484, %v469, %v453
        %v494 = vsel %vm484, %v471, %v455
        %v495 = vsel %vm484, %v473, %v457
        %v496 = vsel %vm484, %v475, %v459
        %v497 = vsel %vm484, %v477, %v461
        %v498 = vsel %vm484, %v479, %v463
        %v499 = vsel %vm484, %v481, %v465
        %v500 = vsel %vm484, %v483, %v467
        %v501 = vsel %vm381, 1, 0
        %v502 = vsel %vm382, 1, 0
        %vm503 = vcmp.eq.s32.totalorder %v501, 1
        %vm504 = vcmp.eq.s32.totalorder %v502, 1
        %v505 = vsel %vm503, %v485, 0.0
        %v506 = vsel %vm504, %v493, 0.0
        %v507 = vsel %vm503, %v486, 0.0
        %v508 = vsel %vm504, %v494, 0.0
        %v509 = vsel %vm503, %v487, 0.0
        %v510 = vsel %vm504, %v495, 0.0
        %v511 = vsel %vm503, %v488, 0.0
        %v512 = vsel %vm504, %v496, 0.0
        %v513 = vsel %vm503, %v489, 0.0
        %v514 = vsel %vm504, %v497, 0.0
        %v515 = vsel %vm503, %v490, 0.0
        %v516 = vsel %vm504, %v498, 0.0
        %v517 = vsel %vm503, %v491, 0.0
        %v518 = vsel %vm504, %v499, 0.0
        %v519 = vsel %vm503, %v492, 0.0
        %v520 = vsel %vm504, %v500, 0.0
        %v521 = vld [vmem:[%s1] sm:$0xff]
        %v522 = vld [vmem:[%s1 + $0x8] sm:$0xff]
        %v523 = vld [vmem:[%s1 + $0x10] sm:$0xff]
        %v524 = vld [vmem:[%s1 + $0x18] sm:$0xff]
        %v525 = vld [vmem:[%s1 + $0x20] sm:$0xff]
        %v526 = vld [vmem:[%s1 + $0x28] sm:$0xff]
        %v527 = vld [vmem:[%s1 + $0x30] sm:$0xff]
        %v528 = vld [vmem:[%s1 + $0x38] sm:$0xff]
        %530 = vset.pattern.permute.xlu0 0
        %531 = vperm.xlu0 %530, %v521
        %v532 = vpop.permute.xlu0 %531
        %535 = vset.pattern.permute.xlu0 0
        %536 = vperm.xlu0 %535, %v522
        %v537 = vpop.permute.xlu0 %536
        %540 = vset.pattern.permute.xlu0 0
        %541 = vperm.xlu0 %540, %v523
        %v542 = vpop.permute.xlu0 %541
        %545 = vset.pattern.permute.xlu0 0
        %546 = vperm.xlu0 %545, %v524
        %v547 = vpop.permute.xlu0 %546
        %550 = vset.pattern.permute.xlu0 0
        %551 = vperm.xlu0 %550, %v525
        %v552 = vpop.permute.xlu0 %551
        %555 = vset.pattern.permute.xlu0 0
        %556 = vperm.xlu0 %555, %v526
        %v557 = vpop.permute.xlu0 %556
        %560 = vset.pattern.permute.xlu0 0
        %561 = vperm.xlu0 %560, %v527
        %v562 = vpop.permute.xlu0 %561
        %565 = vset.pattern.permute.xlu0 0
        %566 = vperm.xlu0 %565, %v528
        %v567 = vpop.permute.xlu0 %566
        %v569 = vmul.f32 %v532, %v436
        %v570 = vmul.f32 %v532, %v437
        %v571 = vmul.f32 %v537, %v438
        %v572 = vmul.f32 %v537, %v439
        %v573 = vmul.f32 %v542, %v440
        %v574 = vmul.f32 %v542, %v441
        %v575 = vmul.f32 %v547, %v442
        %v576 = vmul.f32 %v547, %v443
        %v577 = vmul.f32 %v552, %v444
        %v578 = vmul.f32 %v552, %v445
        %v579 = vmul.f32 %v557, %v446
        %v580 = vmul.f32 %v557, %v447
        %v581 = vmul.f32 %v562, %v448
        %v582 = vmul.f32 %v562, %v449
        %v583 = vmul.f32 %v567, %v450
        %v584 = vmul.f32 %v567, %v451
        %585 = vset.pattern.permute.xlu0 1
        %586 = vperm.xlu0 %585, %v521
        %v587 = vpop.permute.xlu0 %586
        %589 = vset.pattern.permute.xlu0 1
        %590 = vperm.xlu0 %589, %v522
        %v591 = vpop.permute.xlu0 %590
        %593 = vset.pattern.permute.xlu0 1
        %594 = vperm.xlu0 %593, %v523
        %v595 = vpop.permute.xlu0 %594
        %597 = vset.pattern.permute.xlu0 1
        %598 = vperm.xlu0 %597, %v524
        %v599 = vpop.permute.xlu0 %598
        %601 = vset.pattern.permute.xlu0 1
        %602 = vperm.xlu0 %601, %v525
        %v603 = vpop.permute.xlu0 %602
        %605 = vset.pattern.permute.xlu0 1
        %606 = vperm.xlu0 %605, %v526
        %v607 = vpop.permute.xlu0 %606
        %609 = vset.pattern.permute.xlu0 1
        %610 = vperm.xlu0 %609, %v527
        %v611 = vpop.permute.xlu0 %610
        %613 = vset.pattern.permute.xlu0 1
        %614 = vperm.xlu0 %613, %v528
        %v615 = vpop.permute.xlu0 %614
        %v617 = vmul.f32 %v587, %v354
        %v618 = vmul.f32 %v587, %v355
        %v619 = vmul.f32 %v591, %v356
        %v620 = vmul.f32 %v591, %v357
        %v621 = vmul.f32 %v595, %v358
        %v622 = vmul.f32 %v595, %v359
        %v623 = vmul.f32 %v599, %v360
        %v624 = vmul.f32 %v599, %v361
        %v625 = vmul.f32 %v603, %v362
        %v626 = vmul.f32 %v603, %v363
        %v627 = vmul.f32 %v607, %v364
        %v628 = vmul.f32 %v607, %v365
        %v629 = vmul.f32 %v611, %v366
        %v630 = vmul.f32 %v611, %v367
        %v631 = vmul.f32 %v615, %v368
        %v632 = vmul.f32 %v615, %v369
        %v633 = vadd.f32 %v569, %v617
        %v634 = vadd.f32 %v570, %v618
        %v635 = vadd.f32 %v571, %v619
        %v636 = vadd.f32 %v572, %v620
        %v637 = vadd.f32 %v573, %v621
        %v638 = vadd.f32 %v574, %v622
        %v639 = vadd.f32 %v575, %v623
        %v640 = vadd.f32 %v576, %v624
        %v641 = vadd.f32 %v577, %v625
        %v642 = vadd.f32 %v578, %v626
        %v643 = vadd.f32 %v579, %v627
        %v644 = vadd.f32 %v580, %v628
        %v645 = vadd.f32 %v581, %v629
        %v646 = vadd.f32 %v582, %v630
        %v647 = vadd.f32 %v583, %v631
        %v648 = vadd.f32 %v584, %v632
        %649 = vset.pattern.permute.xlu0 2
        %650 = vperm.xlu0 %649, %v521
        %v651 = vpop.permute.xlu0 %650
        %653 = vset.pattern.permute.xlu0 2
        %654 = vperm.xlu0 %653, %v522
        %v655 = vpop.permute.xlu0 %654
        %657 = vset.pattern.permute.xlu0 2
        %658 = vperm.xlu0 %657, %v523
        %v659 = vpop.permute.xlu0 %658
        %661 = vset.pattern.permute.xlu0 2
        %662 = vperm.xlu0 %661, %v524
        %v663 = vpop.permute.xlu0 %662
        %665 = vset.pattern.permute.xlu0 2
        %666 = vperm.xlu0 %665, %v525
        %v667 = vpop.permute.xlu0 %666
        %669 = vset.pattern.permute.xlu0 2
        %670 = vperm.xlu0 %669, %v526
        %v671 = vpop.permute.xlu0 %670
        %673 = vset.pattern.permute.xlu0 2
        %674 = vperm.xlu0 %673, %v527
        %v675 = vpop.permute.xlu0 %674
        %677 = vset.pattern.permute.xlu0 2
        %678 = vperm.xlu0 %677, %v528
        %v679 = vpop.permute.xlu0 %678
        %v681 = vmul.f32 %v651, %v505
        %v682 = vmul.f32 %v651, %v506
        %v683 = vmul.f32 %v655, %v507
        %v684 = vmul.f32 %v655, %v508
        %v685 = vmul.f32 %v659, %v509
        %v686 = vmul.f32 %v659, %v510
        %v687 = vmul.f32 %v663, %v511
        %v688 = vmul.f32 %v663, %v512
        %v689 = vmul.f32 %v667, %v513
        %v690 = vmul.f32 %v667, %v514
        %v691 = vmul.f32 %v671, %v515
        %v692 = vmul.f32 %v671, %v516
        %v693 = vmul.f32 %v675, %v517
        %v694 = vmul.f32 %v675, %v518
        %v695 = vmul.f32 %v679, %v519
        %v696 = vmul.f32 %v679, %v520
        %v697 = vadd.f32 %v633, %v681
        %v698 = vadd.f32 %v634, %v682
        %v699 = vadd.f32 %v635, %v683
        %v700 = vadd.f32 %v636, %v684
        %v701 = vadd.f32 %v637, %v685
        %v702 = vadd.f32 %v638, %v686
        %v703 = vadd.f32 %v639, %v687
        %v704 = vadd.f32 %v640, %v688
        %v705 = vadd.f32 %v641, %v689
        %v706 = vadd.f32 %v642, %v690
        %v707 = vadd.f32 %v643, %v691
        %v708 = vadd.f32 %v644, %v692
        %v709 = vadd.f32 %v645, %v693
        %v710 = vadd.f32 %v646, %v694
        %v711 = vadd.f32 %v647, %v695
        %v712 = vadd.f32 %v648, %v696
        %713 = vset.pattern.permute.xlu0 3
        %714 = vperm.xlu0 %713, %v521
        %v715 = vpop.permute.xlu0 %714
        %717 = vset.pattern.permute.xlu0 3
        %718 = vperm.xlu0 %717, %v522
        %v719 = vpop.permute.xlu0 %718
        %721 = vset.pattern.permute.xlu0 3
        %722 = vperm.xlu0 %721, %v523
        %v723 = vpop.permute.xlu0 %722
        %725 = vset.pattern.permute.xlu0 3
        %726 = vperm.xlu0 %725, %v524
        %v727 = vpop.permute.xlu0 %726
        %729 = vset.pattern.permute.xlu0 3
        %730 = vperm.xlu0 %729, %v525
        %v731 = vpop.permute.xlu0 %730
        %733 = vset.pattern.permute.xlu0 3
        %734 = vperm.xlu0 %733, %v526
        %v735 = vpop.permute.xlu0 %734
        %737 = vset.pattern.permute.xlu0 3
        %738 = vperm.xlu0 %737, %v527
        %v739 = vpop.permute.xlu0 %738
        %741 = vset.pattern.permute.xlu0 3
        %742 = vperm.xlu0 %741, %v528
        %v743 = vpop.permute.xlu0 %742
        %v745 = vmul.f32 %v715, %v436
        %v746 = vmul.f32 %v715, %v437
        %v747 = vmul.f32 %v719, %v438
        %v748 = vmul.f32 %v719, %v439
        %v749 = vmul.f32 %v723, %v440
        %v750 = vmul.f32 %v723, %v441
        %v751 = vmul.f32 %v727, %v442
        %v752 = vmul.f32 %v727, %v443
        %v753 = vmul.f32 %v731, %v444
        %v754 = vmul.f32 %v731, %v445
        %v755 = vmul.f32 %v735, %v446
        %v756 = vmul.f32 %v735, %v447
        %v757 = vmul.f32 %v739, %v448
        %v758 = vmul.f32 %v739, %v449
        %v759 = vmul.f32 %v743, %v450
        %v760 = vmul.f32 %v743, %v451
        %761 = vset.pattern.permute.xlu0 4
        %762 = vperm.xlu0 %761, %v521
        %v763 = vpop.permute.xlu0 %762
        %765 = vset.pattern.permute.xlu0 4
        %766 = vperm.xlu0 %765, %v522
        %v767 = vpop.permute.xlu0 %766
        %769 = vset.pattern.permute.xlu0 4
        %770 = vperm.xlu0 %769, %v523
        %v771 = vpop.permute.xlu0 %770
        %773 = vset.pattern.permute.xlu0 4
        %774 = vperm.xlu0 %773, %v524
        %v775 = vpop.permute.xlu0 %774
        %777 = vset.pattern.permute.xlu0 4
        %778 = vperm.xlu0 %777, %v525
        %v779 = vpop.permute.xlu0 %778
        %781 = vset.pattern.permute.xlu0 4
        %782 = vperm.xlu0 %781, %v526
        %v783 = vpop.permute.xlu0 %782
        %785 = vset.pattern.permute.xlu0 4
        %786 = vperm.xlu0 %785, %v527
        %v787 = vpop.permute.xlu0 %786
        %789 = vset.pattern.permute.xlu0 4
        %790 = vperm.xlu0 %789, %v528
        %v791 = vpop.permute.xlu0 %790
        %v793 = vmul.f32 %v763, %v354
        %v794 = vmul.f32 %v763, %v355
        %v795 = vmul.f32 %v767, %v356
        %v796 = vmul.f32 %v767, %v357
        %v797 = vmul.f32 %v771, %v358
        %v798 = vmul.f32 %v771, %v359
        %v799 = vmul.f32 %v775, %v360
        %v800 = vmul.f32 %v775, %v361
        %v801 = vmul.f32 %v779, %v362
        %v802 = vmul.f32 %v779, %v363
        %v803 = vmul.f32 %v783, %v364
        %v804 = vmul.f32 %v783, %v365
        %v805 = vmul.f32 %v787, %v366
        %v806 = vmul.f32 %v787, %v367
        %v807 = vmul.f32 %v791, %v368
        %v808 = vmul.f32 %v791, %v369
        %v809 = vadd.f32 %v745, %v793
        %v810 = vadd.f32 %v746, %v794
        %v811 = vadd.f32 %v747, %v795
        %v812 = vadd.f32 %v748, %v796
        %v813 = vadd.f32 %v749, %v797
        %v814 = vadd.f32 %v750, %v798
        %v815 = vadd.f32 %v751, %v799
        %v816 = vadd.f32 %v752, %v800
        %v817 = vadd.f32 %v753, %v801
        %v818 = vadd.f32 %v754, %v802
        %v819 = vadd.f32 %v755, %v803
        %v820 = vadd.f32 %v756, %v804
        %v821 = vadd.f32 %v757, %v805
        %v822 = vadd.f32 %v758, %v806
        %v823 = vadd.f32 %v759, %v807
        %v824 = vadd.f32 %v760, %v808
        %825 = vset.pattern.permute.xlu0 5
        %826 = vperm.xlu0 %825, %v521
        %v827 = vpop.permute.xlu0 %826
        %829 = vset.pattern.permute.xlu0 5
        %830 = vperm.xlu0 %829, %v522
        %v831 = vpop.permute.xlu0 %830
        %833 = vset.pattern.permute.xlu0 5
        %834 = vperm.xlu0 %833, %v523
        %v835 = vpop.permute.xlu0 %834
        %837 = vset.pattern.permute.xlu0 5
        %838 = vperm.xlu0 %837, %v524
        %v839 = vpop.permute.xlu0 %838
        %841 = vset.pattern.permute.xlu0 5
        %842 = vperm.xlu0 %841, %v525
        %v843 = vpop.permute.xlu0 %842
        %845 = vset.pattern.permute.xlu0 5
        %846 = vperm.xlu0 %845, %v526
        %v847 = vpop.permute.xlu0 %846
        %849 = vset.pattern.permute.xlu0 5
        %850 = vperm.xlu0 %849, %v527
        %v851 = vpop.permute.xlu0 %850
        %853 = vset.pattern.permute.xlu0 5
        %854 = vperm.xlu0 %853, %v528
        %v855 = vpop.permute.xlu0 %854
        %v857 = vmul.f32 %v827, %v505
        %v858 = vmul.f32 %v827, %v506
        %v859 = vmul.f32 %v831, %v507
        %v860 = vmul.f32 %v831, %v508
        %v861 = vmul.f32 %v835, %v509
        %v862 = vmul.f32 %v835, %v510
        %v863 = vmul.f32 %v839, %v511
        %v864 = vmul.f32 %v839, %v512
        %v865 = vmul.f32 %v843, %v513
        %v866 = vmul.f32 %v843, %v514
        %v867 = vmul.f32 %v847, %v515
        %v868 = vmul.f32 %v847, %v516
        %v869 = vmul.f32 %v851, %v517
        %v870 = vmul.f32 %v851, %v518
        %v871 = vmul.f32 %v855, %v519
        %v872 = vmul.f32 %v855, %v520
        %v873 = vadd.f32 %v809, %v857
        %v874 = vadd.f32 %v810, %v858
        %v875 = vadd.f32 %v811, %v859
        %v876 = vadd.f32 %v812, %v860
        %v877 = vadd.f32 %v813, %v861
        %v878 = vadd.f32 %v814, %v862
        %v879 = vadd.f32 %v815, %v863
        %v880 = vadd.f32 %v816, %v864
        %v881 = vadd.f32 %v817, %v865
        %v882 = vadd.f32 %v818, %v866
        %v883 = vadd.f32 %v819, %v867
        %v884 = vadd.f32 %v820, %v868
        %v885 = vadd.f32 %v821, %v869
        %v886 = vadd.f32 %v822, %v870
        %v887 = vadd.f32 %v823, %v871
        %v888 = vadd.f32 %v824, %v872
        %889 = vset.pattern.permute.xlu0 6
        %890 = vperm.xlu0 %889, %v521
        %v891 = vpop.permute.xlu0 %890
        %893 = vset.pattern.permute.xlu0 6
        %894 = vperm.xlu0 %893, %v522
        %v895 = vpop.permute.xlu0 %894
        %897 = vset.pattern.permute.xlu0 6
        %898 = vperm.xlu0 %897, %v523
        %v899 = vpop.permute.xlu0 %898
        %901 = vset.pattern.permute.xlu0 6
        %902 = vperm.xlu0 %901, %v524
        %v903 = vpop.permute.xlu0 %902
        %905 = vset.pattern.permute.xlu0 6
        %906 = vperm.xlu0 %905, %v525
        %v907 = vpop.permute.xlu0 %906
        %909 = vset.pattern.permute.xlu0 6
        %910 = vperm.xlu0 %909, %v526
        %v911 = vpop.permute.xlu0 %910
        %913 = vset.pattern.permute.xlu0 6
        %914 = vperm.xlu0 %913, %v527
        %v915 = vpop.permute.xlu0 %914
        %917 = vset.pattern.permute.xlu0 6
        %918 = vperm.xlu0 %917, %v528
        %v919 = vpop.permute.xlu0 %918
        %v921 = vmul.f32 %v891, %v436
        %v922 = vmul.f32 %v891, %v437
        %v923 = vmul.f32 %v895, %v438
        %v924 = vmul.f32 %v895, %v439
        %v925 = vmul.f32 %v899, %v440
        %v926 = vmul.f32 %v899, %v441
        %v927 = vmul.f32 %v903, %v442
        %v928 = vmul.f32 %v903, %v443
        %v929 = vmul.f32 %v907, %v444
        %v930 = vmul.f32 %v907, %v445
        %v931 = vmul.f32 %v911, %v446
        %v932 = vmul.f32 %v911, %v447
        %v933 = vmul.f32 %v915, %v448
        %v934 = vmul.f32 %v915, %v449
        %v935 = vmul.f32 %v919, %v450
        %v936 = vmul.f32 %v919, %v451
        %937 = vset.pattern.permute.xlu0 7
        %938 = vperm.xlu0 %937, %v521
        %v939 = vpop.permute.xlu0 %938
        %941 = vset.pattern.permute.xlu0 7
        %942 = vperm.xlu0 %941, %v522
        %v943 = vpop.permute.xlu0 %942
        %945 = vset.pattern.permute.xlu0 7
        %946 = vperm.xlu0 %945, %v523
        %v947 = vpop.permute.xlu0 %946
        %949 = vset.pattern.permute.xlu0 7
        %950 = vperm.xlu0 %949, %v524
        %v951 = vpop.permute.xlu0 %950
        %953 = vset.pattern.permute.xlu0 7
        %954 = vperm.xlu0 %953, %v525
        %v955 = vpop.permute.xlu0 %954
        %957 = vset.pattern.permute.xlu0 7
        %958 = vperm.xlu0 %957, %v526
        %v959 = vpop.permute.xlu0 %958
        %961 = vset.pattern.permute.xlu0 7
        %962 = vperm.xlu0 %961, %v527
        %v963 = vpop.permute.xlu0 %962
        %965 = vset.pattern.permute.xlu0 7
        %966 = vperm.xlu0 %965, %v528
        %v967 = vpop.permute.xlu0 %966
        %v969 = vmul.f32 %v939, %v354
        %v970 = vmul.f32 %v939, %v355
        %v971 = vmul.f32 %v943, %v356
        %v972 = vmul.f32 %v943, %v357
        %v973 = vmul.f32 %v947, %v358
        %v974 = vmul.f32 %v947, %v359
        %v975 = vmul.f32 %v951, %v360
        %v976 = vmul.f32 %v951, %v361
        %v977 = vmul.f32 %v955, %v362
        %v978 = vmul.f32 %v955, %v363
        %v979 = vmul.f32 %v959, %v364
        %v980 = vmul.f32 %v959, %v365
        %v981 = vmul.f32 %v963, %v366
        %v982 = vmul.f32 %v963, %v367
        %v983 = vmul.f32 %v967, %v368
        %v984 = vmul.f32 %v967, %v369
        %v985 = vadd.f32 %v921, %v969
        %v986 = vadd.f32 %v922, %v970
        %v987 = vadd.f32 %v923, %v971
        %v988 = vadd.f32 %v924, %v972
        %v989 = vadd.f32 %v925, %v973
        %v990 = vadd.f32 %v926, %v974
        %v991 = vadd.f32 %v927, %v975
        %v992 = vadd.f32 %v928, %v976
        %v993 = vadd.f32 %v929, %v977
        %v994 = vadd.f32 %v930, %v978
        %v995 = vadd.f32 %v931, %v979
        %v996 = vadd.f32 %v932, %v980
        %v997 = vadd.f32 %v933, %v981
        %v998 = vadd.f32 %v934, %v982
        %v999 = vadd.f32 %v935, %v983
        %v1000 = vadd.f32 %v936, %v984
        %1001 = vset.pattern.permute.xlu0 8
        %1002 = vperm.xlu0 %1001, %v521
        %v1003 = vpop.permute.xlu0 %1002
        %1005 = vset.pattern.permute.xlu0 8
        %1006 = vperm.xlu0 %1005, %v522
        %v1007 = vpop.permute.xlu0 %1006
        %1009 = vset.pattern.permute.xlu0 8
        %1010 = vperm.xlu0 %1009, %v523
        %v1011 = vpop.permute.xlu0 %1010
        %1013 = vset.pattern.permute.xlu0 8
        %1014 = vperm.xlu0 %1013, %v524
        %v1015 = vpop.permute.xlu0 %1014
        %1017 = vset.pattern.permute.xlu0 8
        %1018 = vperm.xlu0 %1017, %v525
        %v1019 = vpop.permute.xlu0 %1018
        %1021 = vset.pattern.permute.xlu0 8
        %1022 = vperm.xlu0 %1021, %v526
        %v1023 = vpop.permute.xlu0 %1022
        %1025 = vset.pattern.permute.xlu0 8
        %1026 = vperm.xlu0 %1025, %v527
        %v1027 = vpop.permute.xlu0 %1026
        %1029 = vset.pattern.permute.xlu0 8
        %1030 = vperm.xlu0 %1029, %v528
        %v1031 = vpop.permute.xlu0 %1030
        %v1033 = vmul.f32 %v1003, %v505
        %v1034 = vmul.f32 %v1003, %v506
        %v1035 = vmul.f32 %v1007, %v507
        %v1036 = vmul.f32 %v1007, %v508
        %v1037 = vmul.f32 %v1011, %v509
        %v1038 = vmul.f32 %v1011, %v510
        %v1039 = vmul.f32 %v1015, %v511
        %v1040 = vmul.f32 %v1015, %v512
        %v1041 = vmul.f32 %v1019, %v513
        %v1042 = vmul.f32 %v1019, %v514
        %v1043 = vmul.f32 %v1023, %v515
        %v1044 = vmul.f32 %v1023, %v516
        %v1045 = vmul.f32 %v1027, %v517
        %v1046 = vmul.f32 %v1027, %v518
        %v1047 = vmul.f32 %v1031, %v519
        %v1048 = vmul.f32 %v1031, %v520
        %v1049 = vadd.f32 %v985, %v1033
        %v1050 = vadd.f32 %v986, %v1034
        %v1051 = vadd.f32 %v987, %v1035
        %v1052 = vadd.f32 %v988, %v1036
        %v1053 = vadd.f32 %v989, %v1037
        %v1054 = vadd.f32 %v990, %v1038
        %v1055 = vadd.f32 %v991, %v1039
        %v1056 = vadd.f32 %v992, %v1040
        %v1057 = vadd.f32 %v993, %v1041
        %v1058 = vadd.f32 %v994, %v1042
        %v1059 = vadd.f32 %v995, %v1043
        %v1060 = vadd.f32 %v996, %v1044
        %v1061 = vadd.f32 %v997, %v1045
        %v1062 = vadd.f32 %v998, %v1046
        %v1063 = vadd.f32 %v999, %v1047
        %v1064 = vadd.f32 %v1000, %v1048
        %1065 = vrot.lane.b32.xlu0 %v697, 16
        %v1066 = vpop.permute.xlu0 %1065
        %1067 = vrot.lane.b32.xlu0 %v699, 16
        %v1068 = vpop.permute.xlu0 %1067
        %1069 = vrot.lane.b32.xlu0 %v701, 16
        %v1070 = vpop.permute.xlu0 %1069
        %1071 = vrot.lane.b32.xlu0 %v703, 16
        %v1072 = vpop.permute.xlu0 %1071
        %1073 = vrot.lane.b32.xlu0 %v705, 16
        %v1074 = vpop.permute.xlu0 %1073
        %1075 = vrot.lane.b32.xlu0 %v707, 16
        %v1076 = vpop.permute.xlu0 %1075
        %1077 = vrot.lane.b32.xlu0 %v709, 16
        %v1078 = vpop.permute.xlu0 %1077
        %1079 = vrot.lane.b32.xlu0 %v711, 16
        %v1080 = vpop.permute.xlu0 %1079
        %1081 = vrot.lane.b32.xlu0 %v698, 16
        %v1082 = vpop.permute.xlu0 %1081
        %1083 = vrot.lane.b32.xlu0 %v700, 16
        %v1084 = vpop.permute.xlu0 %1083
        %1085 = vrot.lane.b32.xlu0 %v702, 16
        %v1086 = vpop.permute.xlu0 %1085
        %1087 = vrot.lane.b32.xlu0 %v704, 16
        %v1088 = vpop.permute.xlu0 %1087
        %1089 = vrot.lane.b32.xlu0 %v706, 16
        %v1090 = vpop.permute.xlu0 %1089
        %1091 = vrot.lane.b32.xlu0 %v708, 16
        %v1092 = vpop.permute.xlu0 %1091
        %1093 = vrot.lane.b32.xlu0 %v710, 16
        %v1094 = vpop.permute.xlu0 %1093
        %1095 = vrot.lane.b32.xlu0 %v712, 16
        %v1096 = vpop.permute.xlu0 %1095
        %vm1097 = vcmp.lt.s32.totalorder %v371, 16
        %v1098 = vsel %vm1097, %v1066, %v1082
        %v1099 = vsel %vm1097, %v1068, %v1084
        %v1100 = vsel %vm1097, %v1070, %v1086
        %v1101 = vsel %vm1097, %v1072, %v1088
        %v1102 = vsel %vm1097, %v1074, %v1090
        %v1103 = vsel %vm1097, %v1076, %v1092
        %v1104 = vsel %vm1097, %v1078, %v1094
        %v1105 = vsel %vm1097, %v1080, %v1096
        %v1106 = vsel %vm1097, %v1082, %v1066
        %v1107 = vsel %vm1097, %v1084, %v1068
        %v1108 = vsel %vm1097, %v1086, %v1070
        %v1109 = vsel %vm1097, %v1088, %v1072
        %v1110 = vsel %vm1097, %v1090, %v1074
        %v1111 = vsel %vm1097, %v1092, %v1076
        %v1112 = vsel %vm1097, %v1094, %v1078
        %v1113 = vsel %vm1097, %v1096, %v1080
        %v1114 = vsel %vm373, 1, 0
        %v1115 = vsel %vm374, 1, 0
        %vm1116 = vcmp.eq.s32.totalorder %v1114, 1
        %vm1117 = vcmp.eq.s32.totalorder %v1115, 1
        %v1118 = vsel %vm1116, %v1106, 0.0
        %v1119 = vsel %vm1117, %v1098, 0.0
        %v1120 = vsel %vm1116, %v1107, 0.0
        %v1121 = vsel %vm1117, %v1099, 0.0
        %v1122 = vsel %vm1116, %v1108, 0.0
        %v1123 = vsel %vm1117, %v1100, 0.0
        %v1124 = vsel %vm1116, %v1109, 0.0
        %v1125 = vsel %vm1117, %v1101, 0.0
        %v1126 = vsel %vm1116, %v1110, 0.0
        %v1127 = vsel %vm1117, %v1102, 0.0
        %v1128 = vsel %vm1116, %v1111, 0.0
        %v1129 = vsel %vm1117, %v1103, 0.0
        %v1130 = vsel %vm1116, %v1112, 0.0
        %v1131 = vsel %vm1117, %v1104, 0.0
        %v1132 = vsel %vm1116, %v1113, 0.0
        %v1133 = vsel %vm1117, %v1105, 0.0
        %v1134 = vadd.f32 %v873, %v1118
        %v1135 = vadd.f32 %v874, %v1119
        %v1136 = vadd.f32 %v875, %v1120
        %v1137 = vadd.f32 %v876, %v1121
        %v1138 = vadd.f32 %v877, %v1122
        %v1139 = vadd.f32 %v878, %v1123
        %v1140 = vadd.f32 %v879, %v1124
        %v1141 = vadd.f32 %v880, %v1125
        %v1142 = vadd.f32 %v881, %v1126
        %v1143 = vadd.f32 %v882, %v1127
        %v1144 = vadd.f32 %v883, %v1128
        %v1145 = vadd.f32 %v884, %v1129
        %v1146 = vadd.f32 %v885, %v1130
        %v1147 = vadd.f32 %v886, %v1131
        %v1148 = vadd.f32 %v887, %v1132
        %v1149 = vadd.f32 %v888, %v1133
        %1150 = vrot.lane.b32.xlu0 %v1049, 112
        %v1151 = vpop.permute.xlu0 %1150
        %1152 = vrot.lane.b32.xlu0 %v1051, 112
        %v1153 = vpop.permute.xlu0 %1152
        %1154 = vrot.lane.b32.xlu0 %v1053, 112
        %v1155 = vpop.permute.xlu0 %1154
        %1156 = vrot.lane.b32.xlu0 %v1055, 112
        %v1157 = vpop.permute.xlu0 %1156
        %1158 = vrot.lane.b32.xlu0 %v1057, 112
        %v1159 = vpop.permute.xlu0 %1158
        %1160 = vrot.lane.b32.xlu0 %v1059, 112
        %v1161 = vpop.permute.xlu0 %1160
        %1162 = vrot.lane.b32.xlu0 %v1061, 112
        %v1163 = vpop.permute.xlu0 %1162
        %1164 = vrot.lane.b32.xlu0 %v1063, 112
        %v1165 = vpop.permute.xlu0 %1164
        %1166 = vrot.lane.b32.xlu0 %v1050, 112
        %v1167 = vpop.permute.xlu0 %1166
        %1168 = vrot.lane.b32.xlu0 %v1052, 112
        %v1169 = vpop.permute.xlu0 %1168
        %1170 = vrot.lane.b32.xlu0 %v1054, 112
        %v1171 = vpop.permute.xlu0 %1170
        %1172 = vrot.lane.b32.xlu0 %v1056, 112
        %v1173 = vpop.permute.xlu0 %1172
        %1174 = vrot.lane.b32.xlu0 %v1058, 112
        %v1175 = vpop.permute.xlu0 %1174
        %1176 = vrot.lane.b32.xlu0 %v1060, 112
        %v1177 = vpop.permute.xlu0 %1176
        %1178 = vrot.lane.b32.xlu0 %v1062, 112
        %v1179 = vpop.permute.xlu0 %1178
        %1180 = vrot.lane.b32.xlu0 %v1064, 112
        %v1181 = vpop.permute.xlu0 %1180
        %vm1182 = vcmp.lt.s32.totalorder %v371, 112
        %v1183 = vsel %vm1182, %v1151, %v1167
        %v1184 = vsel %vm1182, %v1153, %v1169
        %v1185 = vsel %vm1182, %v1155, %v1171
        %v1186 = vsel %vm1182, %v1157, %v1173
        %v1187 = vsel %vm1182, %v1159, %v1175
        %v1188 = vsel %vm1182, %v1161, %v1177
        %v1189 = vsel %vm1182, %v1163, %v1179
        %v1190 = vsel %vm1182, %v1165, %v1181
        %v1191 = vsel %vm1182, %v1167, %v1151
        %v1192 = vsel %vm1182, %v1169, %v1153
        %v1193 = vsel %vm1182, %v1171, %v1155
        %v1194 = vsel %vm1182, %v1173, %v1157
        %v1195 = vsel %vm1182, %v1175, %v1159
        %v1196 = vsel %vm1182, %v1177, %v1161
        %v1197 = vsel %vm1182, %v1179, %v1163
        %v1198 = vsel %vm1182, %v1181, %v1165
        %v1199 = vsel %vm375, 1, 0
        %v1200 = vsel %vm376, 1, 0
        %vm1201 = vcmp.eq.s32.totalorder %v1199, 1
        %vm1202 = vcmp.eq.s32.totalorder %v1200, 1
        %v1203 = vsel %vm1201, %v1183, 0.0
        %v1204 = vsel %vm1202, %v1191, 0.0
        %v1205 = vsel %vm1201, %v1184, 0.0
        %v1206 = vsel %vm1202, %v1192, 0.0
        %v1207 = vsel %vm1201, %v1185, 0.0
        %v1208 = vsel %vm1202, %v1193, 0.0
        %v1209 = vsel %vm1201, %v1186, 0.0
        %v1210 = vsel %vm1202, %v1194, 0.0
        %v1211 = vsel %vm1201, %v1187, 0.0
        %v1212 = vsel %vm1202, %v1195, 0.0
        %v1213 = vsel %vm1201, %v1188, 0.0
        %v1214 = vsel %vm1202, %v1196, 0.0
        %v1215 = vsel %vm1201, %v1189, 0.0
        %v1216 = vsel %vm1202, %v1197, 0.0
        %v1217 = vsel %vm1201, %v1190, 0.0
        %v1218 = vsel %vm1202, %v1198, 0.0
        %v1219 = vadd.f32 %v1134, %v1203
        %v1220 = vadd.f32 %v1135, %v1204
        %v1221 = vadd.f32 %v1136, %v1205
        %v1222 = vadd.f32 %v1137, %v1206
        %v1223 = vadd.f32 %v1138, %v1207
        %v1224 = vadd.f32 %v1139, %v1208
        %v1225 = vadd.f32 %v1140, %v1209
        %v1226 = vadd.f32 %v1141, %v1210
        %v1227 = vadd.f32 %v1142, %v1211
        %v1228 = vadd.f32 %v1143, %v1212
        %v1229 = vadd.f32 %v1144, %v1213
        %v1230 = vadd.f32 %v1145, %v1214
        %v1231 = vadd.f32 %v1146, %v1215
        %v1232 = vadd.f32 %v1147, %v1216
        %v1233 = vadd.f32 %v1148, %v1217
        %v1234 = vadd.f32 %v1149, %v1218
        %v1235 = vld [vmem:[%s2] sm:$0xff]
        %v1236 = vld [vmem:[%s2 + $0x8] sm:$0xff]
        %v1237 = vld [vmem:[%s2 + $0x10] sm:$0xff]
        %v1238 = vld [vmem:[%s2 + $0x18] sm:$0xff]
        %v1239 = vld [vmem:[%s2 + $0x20] sm:$0xff]
        %v1240 = vld [vmem:[%s2 + $0x28] sm:$0xff]
        %v1241 = vld [vmem:[%s2 + $0x30] sm:$0xff]
        %v1242 = vld [vmem:[%s2 + $0x38] sm:$0xff]
        %1244 = vset.pattern.permute.xlu0 0
        %1245 = vperm.xlu0 %1244, %v1235
        %v1246 = vpop.permute.xlu0 %1245
        %1249 = vset.pattern.permute.xlu0 0
        %1250 = vperm.xlu0 %1249, %v1236
        %v1251 = vpop.permute.xlu0 %1250
        %1254 = vset.pattern.permute.xlu0 0
        %1255 = vperm.xlu0 %1254, %v1237
        %v1256 = vpop.permute.xlu0 %1255
        %1259 = vset.pattern.permute.xlu0 0
        %1260 = vperm.xlu0 %1259, %v1238
        %v1261 = vpop.permute.xlu0 %1260
        %1264 = vset.pattern.permute.xlu0 0
        %1265 = vperm.xlu0 %1264, %v1239
        %v1266 = vpop.permute.xlu0 %1265
        %1269 = vset.pattern.permute.xlu0 0
        %1270 = vperm.xlu0 %1269, %v1240
        %v1271 = vpop.permute.xlu0 %1270
        %1274 = vset.pattern.permute.xlu0 0
        %1275 = vperm.xlu0 %1274, %v1241
        %v1276 = vpop.permute.xlu0 %1275
        %1279 = vset.pattern.permute.xlu0 0
        %1280 = vperm.xlu0 %1279, %v1242
        %v1281 = vpop.permute.xlu0 %1280
        %v1283 = vadd.f32 %v1219, %v1246
        %v1284 = vadd.f32 %v1220, %v1246
        %v1285 = vadd.f32 %v1221, %v1251
        %v1286 = vadd.f32 %v1222, %v1251
        %v1287 = vadd.f32 %v1223, %v1256
        %v1288 = vadd.f32 %v1224, %v1256
        %v1289 = vadd.f32 %v1225, %v1261
        %v1290 = vadd.f32 %v1226, %v1261
        %v1291 = vadd.f32 %v1227, %v1266
        %v1292 = vadd.f32 %v1228, %v1266
        %v1293 = vadd.f32 %v1229, %v1271
        %v1294 = vadd.f32 %v1230, %v1271
        %v1295 = vadd.f32 %v1231, %v1276
        %v1296 = vadd.f32 %v1232, %v1276
        %v1297 = vadd.f32 %v1233, %v1281
        %v1298 = vadd.f32 %v1234, %v1281
        %v1299 = vld [vmem:[%s3] sm:$0xff]
        %v1300 = vld [vmem:[%s3 + $0x8] sm:$0xff]
        %v1301 = vld [vmem:[%s3 + $0x10] sm:$0xff]
        %v1302 = vld [vmem:[%s3 + $0x18] sm:$0xff]
        %v1303 = vld [vmem:[%s4] sm:$0xff]
        %v1304 = vld [vmem:[%s4 + $0x8] sm:$0xff]
        %v1305 = vld [vmem:[%s4 + $0x10] sm:$0xff]
        %v1306 = vld [vmem:[%s4 + $0x18] sm:$0xff]
        %v1307 = vld [vmem:[%s5] sm:$0x3]
        %v1308 = vld [vmem:[%s6] sm:$0x3]
        %v1309 = vld [vmem:[%s7] sm:$0xff]
        %v1310 = vld [vmem:[%s7 + $0x8] sm:$0xff]
        %v1311 = vld [vmem:[%s7 + $0x10] sm:$0xff]
        %v1312 = vld [vmem:[%s7 + $0x18] sm:$0xff]
        %v1313 = vld [vmem:[%s8] sm:$0xff]
        %v1314 = vld [vmem:[%s8 + $0x8] sm:$0xff]
        %v1315 = vld [vmem:[%s8 + $0x10] sm:$0xff]
        %v1316 = vld [vmem:[%s8 + $0x18] sm:$0xff]
        %1318 = vset.pattern.permute.xlu0 0
        %1319 = vperm.xlu0 %1318, %v1303
        %v1320 = vpop.permute.xlu0 %1319
        %1323 = vset.pattern.permute.xlu0 0
        %1324 = vperm.xlu0 %1323, %v1304
        %v1325 = vpop.permute.xlu0 %1324
        %1328 = vset.pattern.permute.xlu0 0
        %1329 = vperm.xlu0 %1328, %v1305
        %v1330 = vpop.permute.xlu0 %1329
        %1333 = vset.pattern.permute.xlu0 0
        %1334 = vperm.xlu0 %1333, %v1306
        %v1335 = vpop.permute.xlu0 %1334
        %vm1337 = vcmask 261120
        %v1339 = vsel %vm1337, %v1299, 0
        %v1342 = vsel %vm1337, %v1300, 0
        %v1345 = vsel %vm1337, %v1301, 0
        %v1348 = vsel %vm1337, %v1302, 0
        %1350 = vmatprep.subr.mxu0 0.0
        %1351 = vmatpush1.msra.mxu0 0.0
        %1352 = vmatprep.subr.mxu0 0.0
        %1353 = vmatpush1.msra.mxu0 0.0
        %1354 = vmatprep.subr.mxu0 0.0
        %1355 = vmatpush1.msra.mxu0 0.0
        %1356 = vmatprep.subr.mxu0 0.0
        %1357 = vmatpush1.msra.mxu0 0.0
        %1358 = vmatprep.subr.mxu0 0.0
        %1359 = vmatpush1.msra.mxu0 0.0
        %1360 = vmatprep.subr.mxu0 0.0
        %1361 = vmatpush1.msra.mxu0 0.0
        %1362 = vmatprep.subr.mxu0 0.0
        %1363 = vmatpush1.msra.mxu0 0.0
        %1364 = vmatprep.subr.mxu0 0.0
        %1365 = vmatpush1.msra.mxu0 0.0
        %1366 = vmatprep.subr.mxu0 0.0
        %1367 = vmatpush1.msra.mxu0 0.0
        %1368 = vmatprep.subr.mxu0 0.0
        %1369 = vmatpush1.msra.mxu0 0.0
        %1370 = vmatprep.subr.mxu0 0.0
        %1371 = vmatpush1.msra.mxu0 0.0
        %1372 = vmatprep.subr.mxu0 0.0
        %1373 = vmatpush1.msra.mxu0 0.0
        %1374 = vmatprep.subr.mxu0 %v1290
        %1375 = vmatpush1.msra.mxu0 %v1289
        %1376 = vmatprep.subr.mxu0 %v1288
        %1377 = vmatpush1.msra.mxu0 %v1287
        %1378 = vmatprep.subr.mxu0 %v1286
        %1379 = vmatpush1.msra.mxu0 %v1285
        %1380 = vmatprep.subr.mxu0 %v1284
        %1381 = vmatpush1.msra.mxu0 %v1283
        %1382 = vmatprep.subr.mxu0 0.0
        %1383 = vmatpush2.msra.mxu0 0.0
        %1384 = vmatprep.subr.mxu0 0.0
        %1385 = vmatpush2.msra.mxu0 0.0
        %1386 = vmatprep.subr.mxu0 0.0
        %1387 = vmatpush2.msra.mxu0 0.0
        %1388 = vmatprep.subr.mxu0 0.0
        %1389 = vmatpush2.msra.mxu0 0.0
        %1390 = vmatprep.subr.mxu0 0.0
        %1391 = vmatpush2.msra.mxu0 0.0
        %1392 = vmatprep.subr.mxu0 0.0
        %1393 = vmatpush2.msra.mxu0 0.0
        %1394 = vmatprep.subr.mxu0 0.0
        %1395 = vmatpush2.msra.mxu0 0.0
        %1396 = vmatprep.subr.mxu0 0.0
        %1397 = vmatpush2.msra.mxu0 0.0
        %1398 = vmatprep.subr.mxu0 0.0
        %1399 = vmatpush2.msra.mxu0 0.0
        %1400 = vmatprep.subr.mxu0 0.0
        %1401 = vmatpush2.msra.mxu0 0.0
        %1402 = vmatprep.subr.mxu0 0.0
        %1403 = vmatpush2.msra.mxu0 0.0
        %1404 = vmatprep.subr.mxu0 0.0
        %1405 = vmatpush2.msra.mxu0 0.0
        %1406 = vmatprep.subr.mxu0 0.0
        %1407 = vmatpush2.msra.mxu0 0.0
        %1408 = vmatprep.subr.mxu0 0.0
        %1409 = vmatpush2.msra.mxu0 0.0
        %1410 = vmatprep.subr.mxu0 0.0
        %1411 = vmatpush2.msra.mxu0 0.0
        %1412 = vmatprep.subr.mxu0 0.0
        %1413 = vmatpush2.msra.mxu0 0.0
        %1414 = vmatprep.mubr.f32.mxu0 0.0
        %1415 = vmatmul.mubr.f32.gmra.mxu0 %v1339
        %v1416 = vpop.f32.mrf.mxu0
        %v1417 = vadd.f32 %v1320, %v1416
        %v1418 = vpop.f32.mrf.mxu0
        %v1419 = vadd.f32 %v1320, %v1418
        %1420 = vmatprep.mubr.f32.mxu0 0.0
        %1421 = vmatmul.mubr.f32.gmra.mxu0 %v1342
        %v1422 = vpop.f32.mrf.mxu0
        %v1423 = vadd.f32 %v1325, %v1422
        %v1424 = vpop.f32.mrf.mxu0
        %v1425 = vadd.f32 %v1325, %v1424
        %1426 = vmatprep.mubr.f32.mxu0 0.0
        %1427 = vmatmul.mubr.f32.gmra.mxu0 %v1345
        %v1428 = vpop.f32.mrf.mxu0
        %v1429 = vadd.f32 %v1330, %v1428
        %v1430 = vpop.f32.mrf.mxu0
        %v1431 = vadd.f32 %v1330, %v1430
        %1432 = vmatprep.mubr.f32.mxu0 0.0
        %1433 = vmatmul.mubr.f32.gmra.mxu0 %v1348
        %v1434 = vpop.f32.mrf.mxu0
        %v1435 = vadd.f32 %v1335, %v1434
        %v1436 = vpop.f32.mrf.mxu0
        %v1437 = vadd.f32 %v1335, %v1436
        %1438 = vdwg.mxu0
        %v1439 = vadd.f32 %v354, %v355
        %1440 = vadd.xlane.f32.xlu0 %v1439
        %v1441 = vpop.xlane.xlu0 %1440
        %v1442 = vadd.f32 %v356, %v357
        %1443 = vadd.xlane.f32.xlu0 %v1442
        %v1444 = vpop.xlane.xlu0 %1443
        %v1445 = vadd.f32 %v358, %v359
        %1446 = vadd.xlane.f32.xlu0 %v1445
        %v1447 = vpop.xlane.xlu0 %1446
        %v1448 = vadd.f32 %v360, %v361
        %1449 = vadd.xlane.f32.xlu0 %v1448
        %v1450 = vpop.xlane.xlu0 %1449
        %v1451 = vrcp.pop 256.0
        %v1452 = vmul.f32 %v1441, %v1451
        %v1453 = vmul.f32 %v1444, %v1451
        %v1454 = vmul.f32 %v1447, %v1451
        %v1455 = vmul.f32 %v1450, %v1451
        %v1457 = vsel %vm1337, %v1307, 0
        %1459 = vmatprep.subr.mxu0 0.0
        %1460 = vmatpush1.msra.mxu0 0.0
        %1461 = vmatprep.subr.mxu0 0.0
        %1462 = vmatpush1.msra.mxu0 0.0
        %1463 = vmatprep.subr.mxu0 0.0
        %1464 = vmatpush1.msra.mxu0 0.0
        %1465 = vmatprep.subr.mxu0 0.0
        %1466 = vmatpush1.msra.mxu0 0.0
        %1467 = vmatprep.subr.mxu0 0.0
        %1468 = vmatpush1.msra.mxu0 0.0
        %1469 = vmatprep.subr.mxu0 0.0
        %1470 = vmatpush1.msra.mxu0 0.0
        %1471 = vmatprep.subr.mxu0 0.0
        %1472 = vmatpush1.msra.mxu0 0.0
        %1473 = vmatprep.subr.mxu0 0.0
        %1474 = vmatpush1.msra.mxu0 0.0
        %1475 = vmatprep.subr.mxu0 0.0
        %1476 = vmatpush1.msra.mxu0 0.0
        %1477 = vmatprep.subr.mxu0 0.0
        %1478 = vmatpush1.msra.mxu0 0.0
        %1479 = vmatprep.subr.mxu0 0.0
        %1480 = vmatpush1.msra.mxu0 0.0
        %1481 = vmatprep.subr.mxu0 0.0
        %1482 = vmatpush1.msra.mxu0 0.0
        %1483 = vmatprep.subr.mxu0 0.0
        %1484 = vmatpush1.msra.mxu0 %v1455
        %1485 = vmatprep.subr.mxu0 0.0
        %1486 = vmatpush1.msra.mxu0 %v1454
        %1487 = vmatprep.subr.mxu0 0.0
        %1488 = vmatpush1.msra.mxu0 %v1453
        %1489 = vmatprep.subr.mxu0 0.0
        %1490 = vmatpush1.msra.mxu0 %v1452
        %1491 = vmatprep.subr.mxu0 0.0
        %1492 = vmatpush2.msra.mxu0 0.0
        %1493 = vmatprep.subr.mxu0 0.0
        %1494 = vmatpush2.msra.mxu0 0.0
        %1495 = vmatprep.subr.mxu0 0.0
        %1496 = vmatpush2.msra.mxu0 0.0
        %1497 = vmatprep.subr.mxu0 0.0
        %1498 = vmatpush2.msra.mxu0 0.0
        %1499 = vmatprep.subr.mxu0 0.0
        %1500 = vmatpush2.msra.mxu0 0.0
        %1501 = vmatprep.subr.mxu0 0.0
        %1502 = vmatpush2.msra.mxu0 0.0
        %1503 = vmatprep.subr.mxu0 0.0
        %1504 = vmatpush2.msra.mxu0 0.0
        %1505 = vmatprep.subr.mxu0 0.0
        %1506 = vmatpush2.msra.mxu0 0.0
        %1507 = vmatprep.subr.mxu0 0.0
        %1508 = vmatpush2.msra.mxu0 0.0
        %1509 = vmatprep.subr.mxu0 0.0
        %1510 = vmatpush2.msra.mxu0 0.0
        %1511 = vmatprep.subr.mxu0 0.0
        %1512 = vmatpush2.msra.mxu0 0.0
        %1513 = vmatprep.subr.mxu0 0.0
        %1514 = vmatpush2.msra.mxu0 0.0
        %1515 = vmatprep.subr.mxu0 0.0
        %1516 = vmatpush2.msra.mxu0 0.0
        %1517 = vmatprep.subr.mxu0 0.0
        %1518 = vmatpush2.msra.mxu0 0.0
        %1519 = vmatprep.subr.mxu0 0.0
        %1520 = vmatpush2.msra.mxu0 0.0
        %1521 = vmatprep.subr.mxu0 0.0
        %1522 = vmatpush2.msra.mxu0 0.0
        %1523 = vmatprep.mubr.f32.mxu0 0.0
        %1524 = vmatmul.mubr.f32.gmra.mxu0 %v1457
        %v1525 = vpop.f32.mrf.mxu0
        %v1526 = vadd.f32 %v1308, %v1525
        %v1527 = vpop.f32.mrf.mxu0
        %1528 = vdwg.mxu0
        %v1529 = vmax.f32 %v1526, 0.0
        %vm1530 = vcmask 15360
        %v1532 = vsel %vm1530, %v1309, 0
        %v1535 = vsel %vm1530, %v1310, 0
        %v1538 = vsel %vm1530, %v1311, 0
        %v1541 = vsel %vm1530, %v1312, 0
        %vm1543 = vcmask 1041408
        %v1545 = vsel %vm1543, %v1529, 0
        %1547 = vmatprep.subr.mxu0 0.0
        %1548 = vmatpush1.msra.mxu0 0.0
        %1549 = vmatprep.subr.mxu0 0.0
        %1550 = vmatpush1.msra.mxu0 0.0
        %1551 = vmatprep.subr.mxu0 0.0
        %1552 = vmatpush1.msra.mxu0 0.0
        %1553 = vmatprep.subr.mxu0 0.0
        %1554 = vmatpush1.msra.mxu0 0.0
        %1555 = vmatprep.subr.mxu0 0.0
        %1556 = vmatpush1.msra.mxu0 0.0
        %1557 = vmatprep.subr.mxu0 0.0
        %1558 = vmatpush1.msra.mxu0 0.0
        %1559 = vmatprep.subr.mxu0 0.0
        %1560 = vmatpush1.msra.mxu0 0.0
        %1561 = vmatprep.subr.mxu0 0.0
        %1562 = vmatpush1.msra.mxu0 0.0
        %1563 = vmatprep.subr.mxu0 0.0
        %1564 = vmatpush1.msra.mxu0 0.0
        %1565 = vmatprep.subr.mxu0 0.0
        %1566 = vmatpush1.msra.mxu0 0.0
        %1567 = vmatprep.subr.mxu0 0.0
        %1568 = vmatpush1.msra.mxu0 0.0
        %1569 = vmatprep.subr.mxu0 0.0
        %1570 = vmatpush1.msra.mxu0 0.0
        %1571 = vmatprep.subr.mxu0 0.0
        %1572 = vmatpush1.msra.mxu0 0.0
        %1573 = vmatprep.subr.mxu0 0.0
        %1574 = vmatpush1.msra.mxu0 0.0
        %1575 = vmatprep.subr.mxu0 0.0
        %1576 = vmatpush1.msra.mxu0 0.0
        %1577 = vmatprep.subr.mxu0 0.0
        %1578 = vmatpush1.msra.mxu0 %v1545
        %1579 = vmatprep.subr.mxu0 0.0
        %1580 = vmatpush2.msra.mxu0 0.0
        %1581 = vmatprep.subr.mxu0 0.0
        %1582 = vmatpush2.msra.mxu0 0.0
        %1583 = vmatprep.subr.mxu0 0.0
        %1584 = vmatpush2.msra.mxu0 0.0
        %1585 = vmatprep.subr.mxu0 0.0
        %1586 = vmatpush2.msra.mxu0 0.0
        %1587 = vmatprep.subr.mxu0 0.0
        %1588 = vmatpush2.msra.mxu0 0.0
        %1589 = vmatprep.subr.mxu0 0.0
        %1590 = vmatpush2.msra.mxu0 0.0
        %1591 = vmatprep.subr.mxu0 0.0
        %1592 = vmatpush2.msra.mxu0 0.0
        %1593 = vmatprep.subr.mxu0 0.0
        %1594 = vmatpush2.msra.mxu0 0.0
        %1595 = vmatprep.subr.mxu0 0.0
        %1596 = vmatpush2.msra.mxu0 0.0
        %1597 = vmatprep.subr.mxu0 0.0
        %1598 = vmatpush2.msra.mxu0 0.0
        %1599 = vmatprep.subr.mxu0 0.0
        %1600 = vmatpush2.msra.mxu0 0.0
        %1601 = vmatprep.subr.mxu0 0.0
        %1602 = vmatpush2.msra.mxu0 0.0
        %1603 = vmatprep.subr.mxu0 0.0
        %1604 = vmatpush2.msra.mxu0 0.0
        %1605 = vmatprep.subr.mxu0 0.0
        %1606 = vmatpush2.msra.mxu0 0.0
        %1607 = vmatprep.subr.mxu0 0.0
        %1608 = vmatpush2.msra.mxu0 0.0
        %1609 = vmatprep.subr.mxu0 0.0
        %1610 = vmatpush2.msra.mxu0 0.0
        %1611 = vmatprep.mubr.f32.mxu0 0.0
        %1612 = vmatmul.mubr.f32.gmra.mxu0 %v1532
        %v1613 = vpop.f32.mrf.mxu0
        %v1614 = vadd.f32 %v1313, %v1613
        %v1615 = vpop.f32.mrf.mxu0
        %1616 = vmatprep.mubr.f32.mxu0 0.0
        %1617 = vmatmul.mubr.f32.gmra.mxu0 %v1535
        %v1618 = vpop.f32.mrf.mxu0
        %v1619 = vadd.f32 %v1314, %v1618
        %v1620 = vpop.f32.mrf.mxu0
        %1621 = vmatprep.mubr.f32.mxu0 0.0
        %1622 = vmatmul.mubr.f32.gmra.mxu0 %v1538
        %v1623 = vpop.f32.mrf.mxu0
        %v1624 = vadd.f32 %v1315, %v1623
        %v1625 = vpop.f32.mrf.mxu0
        %1626 = vmatprep.mubr.f32.mxu0 0.0
        %1627 = vmatmul.mubr.f32.gmra.mxu0 %v1541
        %v1628 = vpop.f32.mrf.mxu0
        %v1629 = vadd.f32 %v1316, %v1628
        %v1630 = vpop.f32.mrf.mxu0
        %1631 = vdwg.mxu0
        %v1632 = vxor.u32 %v1614, 2147483648
        %v1633 = vxor.u32 %v1619, 2147483648
        %v1634 = vxor.u32 %v1624, 2147483648
        %v1635 = vxor.u32 %v1629, 2147483648
        %v1636 = vmul.f32 %v1632, 1.442695
        %v1637 = vpow.pop %v1636
        %v1638 = vmul.f32 %v1633, 1.442695
        %v1639 = vpow.pop %v1638
        %v1640 = vmul.f32 %v1634, 1.442695
        %v1641 = vpow.pop %v1640
        %v1642 = vmul.f32 %v1635, 1.442695
        %v1643 = vpow.pop %v1642
        %v1644 = vadd.f32 %v1637, 1.0
        %v1645 = vadd.f32 %v1639, 1.0
        %v1646 = vadd.f32 %v1641, 1.0
        %v1647 = vadd.f32 %v1643, 1.0
        %v1648 = vrcp.pop %v1644
        %v1649 = vmul.f32 1.0, %v1648
        %v1650 = vrcp.pop %v1645
        %v1651 = vmul.f32 1.0, %v1650
        %v1652 = vrcp.pop %v1646
        %v1653 = vmul.f32 1.0, %v1652
        %v1654 = vrcp.pop %v1647
        %v1655 = vmul.f32 1.0, %v1654
        %1657 = vset.pattern.permute.xlu0 0
        %1658 = vperm.xlu0 %1657, %v1649
        %v1659 = vpop.permute.xlu0 %1658
        %1662 = vset.pattern.permute.xlu0 0
        %1663 = vperm.xlu0 %1662, %v1651
        %v1664 = vpop.permute.xlu0 %1663
        %1667 = vset.pattern.permute.xlu0 0
        %1668 = vperm.xlu0 %1667, %v1653
        %v1669 = vpop.permute.xlu0 %1668
        %1672 = vset.pattern.permute.xlu0 0
        %1673 = vperm.xlu0 %1672, %v1655
        %v1674 = vpop.permute.xlu0 %1673
        %v1676 = vmul.f32 %v354, %v1659
        %v1677 = vmul.f32 %v355, %v1659
        %v1678 = vmul.f32 %v356, %v1664
        %v1679 = vmul.f32 %v357, %v1664
        %v1680 = vmul.f32 %v358, %v1669
        %v1681 = vmul.f32 %v359, %v1669
        %v1682 = vmul.f32 %v360, %v1674
        %v1683 = vmul.f32 %v361, %v1674
        %v1684 = vadd.f32 %v1417, %v1676
        %v1685 = vadd.f32 %v1419, %v1677
        %v1686 = vadd.f32 %v1423, %v1678
        %v1687 = vadd.f32 %v1425, %v1679
        %v1688 = vadd.f32 %v1429, %v1680
        %v1689 = vadd.f32 %v1431, %v1681
        %v1690 = vadd.f32 %v1435, %v1682
        %v1691 = vadd.f32 %v1437, %v1683
        %1692 = vst [vmem:[%s351] sm:$0xff] %v1684
        %1693 = vst [vmem:[%s351 + $0x8] sm:$0xff] %v1685
        %1694 = vst [vmem:[%s351 + $0x10] sm:$0xff] %v1686
        %1695 = vst [vmem:[%s351 + $0x18] sm:$0xff] %v1687
        %1696 = vst [vmem:[%s351 + $0x20] sm:$0xff] %v1688
        %1697 = vst [vmem:[%s351 + $0x28] sm:$0xff] %v1689
        %1698 = vst [vmem:[%s351 + $0x30] sm:$0xff] %v1690
        %1699 = vst [vmem:[%s351 + $0x38] sm:$0xff] %v1691
        %1700 = vmatprep.subr.mxu0 0.0
        %1701 = vmatpush1.msra.mxu0 0.0
        %1702 = vmatprep.subr.mxu0 0.0
        %1703 = vmatpush1.msra.mxu0 0.0
        %1704 = vmatprep.subr.mxu0 0.0
        %1705 = vmatpush1.msra.mxu0 0.0
        %1706 = vmatprep.subr.mxu0 0.0
        %1707 = vmatpush1.msra.mxu0 0.0
        %1708 = vmatprep.subr.mxu0 0.0
        %1709 = vmatpush1.msra.mxu0 0.0
        %1710 = vmatprep.subr.mxu0 0.0
        %1711 = vmatpush1.msra.mxu0 0.0
        %1712 = vmatprep.subr.mxu0 0.0
        %1713 = vmatpush1.msra.mxu0 0.0
        %1714 = vmatprep.subr.mxu0 0.0
        %1715 = vmatpush1.msra.mxu0 0.0
        %1716 = vmatprep.subr.mxu0 0.0
        %1717 = vmatpush1.msra.mxu0 0.0
        %1718 = vmatprep.subr.mxu0 0.0
        %1719 = vmatpush1.msra.mxu0 0.0
        %1720 = vmatprep.subr.mxu0 0.0
        %1721 = vmatpush1.msra.mxu0 0.0
        %1722 = vmatprep.subr.mxu0 0.0
        %1723 = vmatpush1.msra.mxu0 0.0
        %1724 = vmatprep.subr.mxu0 %v1298
        %1725 = vmatpush1.msra.mxu0 %v1297
        %1726 = vmatprep.subr.mxu0 %v1296
        %1727 = vmatpush1.msra.mxu0 %v1295
        %1728 = vmatprep.subr.mxu0 %v1294
        %1729 = vmatpush1.msra.mxu0 %v1293
        %1730 = vmatprep.subr.mxu0 %v1292
        %1731 = vmatpush1.msra.mxu0 %v1291
        %1732 = vmatprep.subr.mxu0 0.0
        %1733 = vmatpush2.msra.mxu0 0.0
        %1734 = vmatprep.subr.mxu0 0.0
        %1735 = vmatpush2.msra.mxu0 0.0
        %1736 = vmatprep.subr.mxu0 0.0
        %1737 = vmatpush2.msra.mxu0 0.0
        %1738 = vmatprep.subr.mxu0 0.0
        %1739 = vmatpush2.msra.mxu0 0.0
        %1740 = vmatprep.subr.mxu0 0.0
        %1741 = vmatpush2.msra.mxu0 0.0
        %1742 = vmatprep.subr.mxu0 0.0
        %1743 = vmatpush2.msra.mxu0 0.0
        %1744 = vmatprep.subr.mxu0 0.0
        %1745 = vmatpush2.msra.mxu0 0.0
        %1746 = vmatprep.subr.mxu0 0.0
        %1747 = vmatpush2.msra.mxu0 0.0
        %1748 = vmatprep.subr.mxu0 0.0
        %1749 = vmatpush2.msra.mxu0 0.0
        %1750 = vmatprep.subr.mxu0 0.0
        %1751 = vmatpush2.msra.mxu0 0.0
        %1752 = vmatprep.subr.mxu0 0.0
        %1753 = vmatpush2.msra.mxu0 0.0
        %1754 = vmatprep.subr.mxu0 0.0
        %1755 = vmatpush2.msra.mxu0 0.0
        %1756 = vmatprep.subr.mxu0 0.0
        %1757 = vmatpush2.msra.mxu0 0.0
        %1758 = vmatprep.subr.mxu0 0.0
        %1759 = vmatpush2.msra.mxu0 0.0
        %1760 = vmatprep.subr.mxu0 0.0
        %1761 = vmatpush2.msra.mxu0 0.0
        %1762 = vmatprep.subr.mxu0 0.0
        %1763 = vmatpush2.msra.mxu0 0.0
        %1764 = vmatprep.mubr.f32.mxu0 0.0
        %1765 = vmatmul.mubr.f32.gmra.mxu0 %v1339
        %v1766 = vpop.f32.mrf.mxu0
        %v1767 = vadd.f32 %v1320, %v1766
        %v1768 = vpop.f32.mrf.mxu0
        %v1769 = vadd.f32 %v1320, %v1768
        %1770 = vmatprep.mubr.f32.mxu0 0.0
        %1771 = vmatmul.mubr.f32.gmra.mxu0 %v1342
        %v1772 = vpop.f32.mrf.mxu0
        %v1773 = vadd.f32 %v1325, %v1772
        %v1774 = vpop.f32.mrf.mxu0
        %v1775 = vadd.f32 %v1325, %v1774
        %1776 = vmatprep.mubr.f32.mxu0 0.0
        %1777 = vmatmul.mubr.f32.gmra.mxu0 %v1345
        %v1778 = vpop.f32.mrf.mxu0
        %v1779 = vadd.f32 %v1330, %v1778
        %v1780 = vpop.f32.mrf.mxu0
        %v1781 = vadd.f32 %v1330, %v1780
        %1782 = vmatprep.mubr.f32.mxu0 0.0
        %1783 = vmatmul.mubr.f32.gmra.mxu0 %v1348
        %v1784 = vpop.f32.mrf.mxu0
        %v1785 = vadd.f32 %v1335, %v1784
        %v1786 = vpop.f32.mrf.mxu0
        %v1787 = vadd.f32 %v1335, %v1786
        %1788 = vdwg.mxu0
        %v1789 = vadd.f32 %v362, %v363
        %1790 = vadd.xlane.f32.xlu0 %v1789
        %v1791 = vpop.xlane.xlu0 %1790
        %v1792 = vadd.f32 %v364, %v365
        %1793 = vadd.xlane.f32.xlu0 %v1792
        %v1794 = vpop.xlane.xlu0 %1793
        %v1795 = vadd.f32 %v366, %v367
        %1796 = vadd.xlane.f32.xlu0 %v1795
        %v1797 = vpop.xlane.xlu0 %1796
        %v1798 = vadd.f32 %v368, %v369
        %1799 = vadd.xlane.f32.xlu0 %v1798
        %v1800 = vpop.xlane.xlu0 %1799
        %v1801 = vmul.f32 %v1791, %v1451
        %v1802 = vmul.f32 %v1794, %v1451
        %v1803 = vmul.f32 %v1797, %v1451
        %v1804 = vmul.f32 %v1800, %v1451
        %1805 = vmatprep.subr.mxu0 0.0
        %1806 = vmatpush1.msra.mxu0 0.0
        %1807 = vmatprep.subr.mxu0 0.0
        %1808 = vmatpush1.msra.mxu0 0.0
        %1809 = vmatprep.subr.mxu0 0.0
        %1810 = vmatpush1.msra.mxu0 0.0
        %1811 = vmatprep.subr.mxu0 0.0
        %1812 = vmatpush1.msra.mxu0 0.0
        %1813 = vmatprep.subr.mxu0 0.0
        %1814 = vmatpush1.msra.mxu0 0.0
        %1815 = vmatprep.subr.mxu0 0.0
        %1816 = vmatpush1.msra.mxu0 0.0
        %1817 = vmatprep.subr.mxu0 0.0
        %1818 = vmatpush1.msra.mxu0 0.0
        %1819 = vmatprep.subr.mxu0 0.0
        %1820 = vmatpush1.msra.mxu0 0.0
        %1821 = vmatprep.subr.mxu0 0.0
        %1822 = vmatpush1.msra.mxu0 0.0
        %1823 = vmatprep.subr.mxu0 0.0
        %1824 = vmatpush1.msra.mxu0 0.0
        %1825 = vmatprep.subr.mxu0 0.0
        %1826 = vmatpush1.msra.mxu0 0.0
        %1827 = vmatprep.subr.mxu0 0.0
        %1828 = vmatpush1.msra.mxu0 0.0
        %1829 = vmatprep.subr.mxu0 0.0
        %1830 = vmatpush1.msra.mxu0 %v1804
        %1831 = vmatprep.subr.mxu0 0.0
        %1832 = vmatpush1.msra.mxu0 %v1803
        %1833 = vmatprep.subr.mxu0 0.0
        %1834 = vmatpush1.msra.mxu0 %v1802
        %1835 = vmatprep.subr.mxu0 0.0
        %1836 = vmatpush1.msra.mxu0 %v1801
        %1837 = vmatprep.subr.mxu0 0.0
        %1838 = vmatpush2.msra.mxu0 0.0
        %1839 = vmatprep.subr.mxu0 0.0
        %1840 = vmatpush2.msra.mxu0 0.0
        %1841 = vmatprep.subr.mxu0 0.0
        %1842 = vmatpush2.msra.mxu0 0.0
        %1843 = vmatprep.subr.mxu0 0.0
        %1844 = vmatpush2.msra.mxu0 0.0
        %1845 = vmatprep.subr.mxu0 0.0
        %1846 = vmatpush2.msra.mxu0 0.0
        %1847 = vmatprep.subr.mxu0 0.0
        %1848 = vmatpush2.msra.mxu0 0.0
        %1849 = vmatprep.subr.mxu0 0.0
        %1850 = vmatpush2.msra.mxu0 0.0
        %1851 = vmatprep.subr.mxu0 0.0
        %1852 = vmatpush2.msra.mxu0 0.0
        %1853 = vmatprep.subr.mxu0 0.0
        %1854 = vmatpush2.msra.mxu0 0.0
        %1855 = vmatprep.subr.mxu0 0.0
        %1856 = vmatpush2.msra.mxu0 0.0
        %1857 = vmatprep.subr.mxu0 0.0
        %1858 = vmatpush2.msra.mxu0 0.0
        %1859 = vmatprep.subr.mxu0 0.0
        %1860 = vmatpush2.msra.mxu0 0.0
        %1861 = vmatprep.subr.mxu0 0.0
        %1862 = vmatpush2.msra.mxu0 0.0
        %1863 = vmatprep.subr.mxu0 0.0
        %1864 = vmatpush2.msra.mxu0 0.0
        %1865 = vmatprep.subr.mxu0 0.0
        %1866 = vmatpush2.msra.mxu0 0.0
        %1867 = vmatprep.subr.mxu0 0.0
        %1868 = vmatpush2.msra.mxu0 0.0
        %1869 = vmatprep.mubr.f32.mxu0 0.0
        %1870 = vmatmul.mubr.f32.gmra.mxu0 %v1457
        %v1871 = vpop.f32.mrf.mxu0
        %v1872 = vadd.f32 %v1308, %v1871
        %v1873 = vpop.f32.mrf.mxu0
        %1874 = vdwg.mxu0
        %v1875 = vmax.f32 %v1872, 0.0
        %v1877 = vsel %vm1543, %v1875, 0
        %1879 = vmatprep.subr.mxu0 0.0
        %1880 = vmatpush1.msra.mxu0 0.0
        %1881 = vmatprep.subr.mxu0 0.0
        %1882 = vmatpush1.msra.mxu0 0.0
        %1883 = vmatprep.subr.mxu0 0.0
        %1884 = vmatpush1.msra.mxu0 0.0
        %1885 = vmatprep.subr.mxu0 0.0
        %1886 = vmatpush1.msra.mxu0 0.0
        %1887 = vmatprep.subr.mxu0 0.0
        %1888 = vmatpush1.msra.mxu0 0.0
        %1889 = vmatprep.subr.mxu0 0.0
        %1890 = vmatpush1.msra.mxu0 0.0
        %1891 = vmatprep.subr.mxu0 0.0
        %1892 = vmatpush1.msra.mxu0 0.0
        %1893 = vmatprep.subr.mxu0 0.0
        %1894 = vmatpush1.msra.mxu0 0.0
        %1895 = vmatprep.subr.mxu0 0.0
        %1896 = vmatpush1.msra.mxu0 0.0
        %1897 = vmatprep.subr.mxu0 0.0
        %1898 = vmatpush1.msra.mxu0 0.0
        %1899 = vmatprep.subr.mxu0 0.0
        %1900 = vmatpush1.msra.mxu0 0.0
        %1901 = vmatprep.subr.mxu0 0.0
        %1902 = vmatpush1.msra.mxu0 0.0
        %1903 = vmatprep.subr.mxu0 0.0
        %1904 = vmatpush1.msra.mxu0 0.0
        %1905 = vmatprep.subr.mxu0 0.0
        %1906 = vmatpush1.msra.mxu0 0.0
        %1907 = vmatprep.subr.mxu0 0.0
        %1908 = vmatpush1.msra.mxu0 0.0
        %1909 = vmatprep.subr.mxu0 0.0
        %1910 = vmatpush1.msra.mxu0 %v1877
        %1911 = vmatprep.subr.mxu0 0.0
        %1912 = vmatpush2.msra.mxu0 0.0
        %1913 = vmatprep.subr.mxu0 0.0
        %1914 = vmatpush2.msra.mxu0 0.0
        %1915 = vmatprep.subr.mxu0 0.0
        %1916 = vmatpush2.msra.mxu0 0.0
        %1917 = vmatprep.subr.mxu0 0.0
        %1918 = vmatpush2.msra.mxu0 0.0
        %1919 = vmatprep.subr.mxu0 0.0
        %1920 = vmatpush2.msra.mxu0 0.0
        %1921 = vmatprep.subr.mxu0 0.0
        %1922 = vmatpush2.msra.mxu0 0.0
        %1923 = vmatprep.subr.mxu0 0.0
        %1924 = vmatpush2.msra.mxu0 0.0
        %1925 = vmatprep.subr.mxu0 0.0
        %1926 = vmatpush2.msra.mxu0 0.0
        %1927 = vmatprep.subr.mxu0 0.0
        %1928 = vmatpush2.msra.mxu0 0.0
        %1929 = vmatprep.subr.mxu0 0.0
        %1930 = vmatpush2.msra.mxu0 0.0
        %1931 = vmatprep.subr.mxu0 0.0
        %1932 = vmatpush2.msra.mxu0 0.0
        %1933 = vmatprep.subr.mxu0 0.0
        %1934 = vmatpush2.msra.mxu0 0.0
        %1935 = vmatprep.subr.mxu0 0.0
        %1936 = vmatpush2.msra.mxu0 0.0
        %1937 = vmatprep.subr.mxu0 0.0
        %1938 = vmatpush2.msra.mxu0 0.0
        %1939 = vmatprep.subr.mxu0 0.0
        %1940 = vmatpush2.msra.mxu0 0.0
        %1941 = vmatprep.subr.mxu0 0.0
        %1942 = vmatpush2.msra.mxu0 0.0
        %1943 = vmatprep.mubr.f32.mxu0 0.0
        %1944 = vmatmul.mubr.f32.gmra.mxu0 %v1532
        %v1945 = vpop.f32.mrf.mxu0
        %v1946 = vadd.f32 %v1313, %v1945
        %v1947 = vpop.f32.mrf.mxu0
        %1948 = vmatprep.mubr.f32.mxu0 0.0
        %1949 = vmatmul.mubr.f32.gmra.mxu0 %v1535
        %v1950 = vpop.f32.mrf.mxu0
        %v1951 = vadd.f32 %v1314, %v1950
        %v1952 = vpop.f32.mrf.mxu0
        %1953 = vmatprep.mubr.f32.mxu0 0.0
        %1954 = vmatmul.mubr.f32.gmra.mxu0 %v1538
        %v1955 = vpop.f32.mrf.mxu0
        %v1956 = vadd.f32 %v1315, %v1955
        %v1957 = vpop.f32.mrf.mxu0
        %1958 = vmatprep.mubr.f32.mxu0 0.0
        %1959 = vmatmul.mubr.f32.gmra.mxu0 %v1541
        %v1960 = vpop.f32.mrf.mxu0
        %v1961 = vadd.f32 %v1316, %v1960
        %v1962 = vpop.f32.mrf.mxu0
        %1963 = vdwg.mxu0
        %v1964 = vxor.u32 %v1946, 2147483648
        %v1965 = vxor.u32 %v1951, 2147483648
        %v1966 = vxor.u32 %v1956, 2147483648
        %v1967 = vxor.u32 %v1961, 2147483648
        %v1968 = vmul.f32 %v1964, 1.442695
        %v1969 = vpow.pop %v1968
        %v1970 = vmul.f32 %v1965, 1.442695
        %v1971 = vpow.pop %v1970
        %v1972 = vmul.f32 %v1966, 1.442695
        %v1973 = vpow.pop %v1972
        %v1974 = vmul.f32 %v1967, 1.442695
        %v1975 = vpow.pop %v1974
        %v1976 = vadd.f32 %v1969, 1.0
        %v1977 = vadd.f32 %v1971, 1.0
        %v1978 = vadd.f32 %v1973, 1.0
        %v1979 = vadd.f32 %v1975, 1.0
        %v1980 = vrcp.pop %v1976
        %v1981 = vmul.f32 1.0, %v1980
        %v1982 = vrcp.pop %v1977
        %v1983 = vmul.f32 1.0, %v1982
        %v1984 = vrcp.pop %v1978
        %v1985 = vmul.f32 1.0, %v1984
        %v1986 = vrcp.pop %v1979
        %v1987 = vmul.f32 1.0, %v1986
        %1989 = vset.pattern.permute.xlu0 0
        %1990 = vperm.xlu0 %1989, %v1981
        %v1991 = vpop.permute.xlu0 %1990
        %1994 = vset.pattern.permute.xlu0 0
        %1995 = vperm.xlu0 %1994, %v1983
        %v1996 = vpop.permute.xlu0 %1995
        %1999 = vset.pattern.permute.xlu0 0
        %2000 = vperm.xlu0 %1999, %v1985
        %v2001 = vpop.permute.xlu0 %2000
        %2004 = vset.pattern.permute.xlu0 0
        %2005 = vperm.xlu0 %2004, %v1987
        %v2006 = vpop.permute.xlu0 %2005
        %v2008 = vmul.f32 %v362, %v1991
        %v2009 = vmul.f32 %v363, %v1991
        %v2010 = vmul.f32 %v364, %v1996
        %v2011 = vmul.f32 %v365, %v1996
        %v2012 = vmul.f32 %v366, %v2001
        %v2013 = vmul.f32 %v367, %v2001
        %v2014 = vmul.f32 %v368, %v2006
        %v2015 = vmul.f32 %v369, %v2006
        %v2016 = vadd.f32 %v1767, %v2008
        %v2017 = vadd.f32 %v1769, %v2009
        %v2018 = vadd.f32 %v1773, %v2010
        %v2019 = vadd.f32 %v1775, %v2011
        %v2020 = vadd.f32 %v1779, %v2012
        %v2021 = vadd.f32 %v1781, %v2013
        %v2022 = vadd.f32 %v1785, %v2014
        %v2023 = vadd.f32 %v1787, %v2015
        %2024 = vst [vmem:[%s351 + $0x40] sm:$0xff] %v2016
        %2025 = vst [vmem:[%s351 + $0x48] sm:$0xff] %v2017
        %2026 = vst [vmem:[%s351 + $0x50] sm:$0xff] %v2018
        %2027 = vst [vmem:[%s351 + $0x58] sm:$0xff] %v2019
        %2028 = vst [vmem:[%s351 + $0x60] sm:$0xff] %v2020
        %2029 = vst [vmem:[%s351 + $0x68] sm:$0xff] %v2021
        %2030 = vst [vmem:[%s351 + $0x70] sm:$0xff] %v2022
        %2031 = vst [vmem:[%s351 + $0x78] sm:$0xff] %v2023
        %s2032 = sand.u32 %s228, 1
        %s2033 = scalar_lea.sflag [#allocation4], %s2032
        %s2034 = sand.u32 %s228, 1
        %s2035 = smul.addr %s2034, 128
        %s2036 = scalar_lea.vmem [#allocation5], %s2035
        // Predicated region
        $region61: #{tpu_custom_call.1} parent=55 // pred_check
          %p2037 = pneg %p238
        $region62: #{tpu_custom_call.1} parent=55 // pred_check_branch
          %2039 = sbr.rel (%p2037) target = $region64
        $region63: #{tpu_custom_call.1} parent=55 // pred_region
          %s2040 = smul.u32 8, %s26
          %s2042 = ssub.s32 2048, 2048
          %2043 = vsyncadd %s2033, %s2042
          %s2044 = smul.addr %s2040, 2
          %s2045 = smul.addr %s2044, 128
          %s2046 = scalar_lea.hbm %s9, %s2045
          %s2047 = sshll.u32 %s2036, 4
          %s2048 = int_to_ptr.vmem [resolvable:$true] %s2047
          %2053 = dma.vmem_to_hbm [thread:$0]  %s2048, 2048, %s2046, %s2033, 256, 256, 16
        $region64: #{tpu_custom_call.1} parent=55 // pred_fallthru
          _
      $region56: #{tpu_custom_call.1} parent=5 // pred_fallthru
        _
      %p2054 = scmp.le.s32.totalorder 2, %s21
      // Predicated region
      $region65: #{tpu_custom_call.1} parent=5 // pred_check
        %p2055 = pneg %p2054
      $region66: #{tpu_custom_call.1} parent=5 // pred_check_branch
        %2057 = sbr.rel (%p2055) target = $region68
      $region67: #{tpu_custom_call.1} parent=5 // pred_region
        %s2058 = ssub.s32 %s21, 2
        // Predicated region
        $region69: #{tpu_custom_call.1} parent=67 // pred_check
          %p2059 = pneg %p244
        $region70: #{tpu_custom_call.1} parent=67 // pred_check_branch
          %2061 = sbr.rel (%p2059) target = $region72
        $region71: #{tpu_custom_call.1} parent=67 // pred_region
          %s2062 = sand.u32 %s229, 1
          %s2063 = scalar_lea.sflag [#allocation4], %s2062
          %s2064 = sand.u32 %s229, 1
          %s2065 = smul.addr %s2064, 128
          %s2066 = scalar_lea.vmem [#allocation5], %s2065
          %2067 = dma.done %s2063, 2048
        $region72: #{tpu_custom_call.1} parent=67 // pred_fallthru
          _
      $region68: #{tpu_custom_call.1} parent=5 // pred_fallthru
        _
    $region6: #{tpu_custom_call.1} parent=1 // loop_footer
      %s25 = sadd.s32 1, %s21
    $region7: #{tpu_custom_call.1} parent=1 // loop_footer_branch
      %20 = sbr.rel target = $region3
    $region8: #{tpu_custom_call.1} parent=1 // loop_exit
      _
    %2068 = vsyncpa [#allocation3], 1
    %s2069 = scalar_lea.sflag [#allocation3], 1
    %2070 = vsyncpa %s2069, 1
    %2071 = vsyncpa [#allocation4], 1
    %s2072 = scalar_lea.sflag [#allocation4], 1
    %2073 = vsyncpa %s2072, 1

</llo_original>
